<compile_context>
chip_gen: v7x
topology: tpu7x:2x2x1
jax: 0.10.0
libtpu: 0.0.40
codegen_flags: <defaults>
</compile_context>

<pallas_src>
import jax
import jax.numpy as jnp
import numpy as np
from jax.experimental import pallas as pl
from jax.experimental.pallas import tpu as pltpu

LANE = 128  # lane-dense output slab width


def _mlm_kernel(
    x_ref,                               # (TB, input_dim)      bf16
    w1_ref, b1_ref,                      # layer1: in -> H
    wf1_ref, bf1_ref, wf2_ref, bf2_ref,  # feature: H -> H/2 -> H
    wh1_ref, bh1_ref,                    # fused heads#1: (H, LANE+4H)
    ww2_ref, bw2_ref,                    # worst fc2: (2H, 2H)
    wh2_ref, bh2_ref,                    # fused heads#2: (4H, LANE)
    h_ref, slab_ref,                     # outputs: (TB, H), (TB, LANE)
):
    def lin(v, w_ref, b_ref):
        return jnp.dot(v, w_ref[...], preferred_element_type=jnp.float32) + b_ref[...]

    relu = lambda v: jnp.maximum(v, 0.0)
    bf16 = lambda v: v.astype(jnp.bfloat16)

    x = x_ref[...]                                   # (TB, in) bf16

    # extract_feature: layer1 + feature (dropout == identity)
    h1 = bf16(relu(lin(x, w1_ref, b1_ref)))          # (TB, H)
    hf = bf16(relu(lin(h1, wf1_ref, bf1_ref)))       # (TB, H/2)
    h_a = relu(lin(hf, wf2_ref, bf2_ref))            # (TB, H) f32
    h_ref[...] = h_a

    # fused heads #1: classifier | pseudo fc1 | worst fc1 in one wide matmul
    h_b = bf16(h_a)
    z = lin(h_b, wh1_ref, bh1_ref)                   # (TB, LANE + 4H) f32
    H2 = ww2_ref.shape[0]                            # 2H
    y_part = z[:, :LANE]                             # classifier at cols 0:2, zeros elsewhere
    p = bf16(relu(z[:, LANE:LANE + H2]))             # pseudo hidden (TB, 2H)
    w1a = bf16(relu(z[:, LANE + H2:]))               # worst hidden1 (TB, 2H)

    # worst fc2
    w2 = bf16(relu(lin(w1a, ww2_ref, bw2_ref)))      # (TB, 2H)

    # fused heads #2: pseudo fc2 -> slab cols 2:4, worst fc3 -> slab cols 4:6
    tail_in = jnp.concatenate([p, w2], axis=1)       # (TB, 4H)
    tail = lin(tail_in, wh2_ref, bh2_ref)            # (TB, LANE) f32

    # disjoint columns -> simple add assembles the lane-dense output slab
    slab_ref[...] = y_part + tail


def prepare_params(p):
    """One-time layout transform: pack head weights into lane-dense fused
    matrices (zero-padded), keep bf16 weights / f32 biases."""
    H = p["w1"].shape[1]
    H2 = 2 * H
    bf16, f32 = jnp.bfloat16, jnp.float32

    # fused head #1: (H, LANE + 4H)
    wh1 = jnp.zeros((H, LANE + 2 * H2), bf16)
    wh1 = wh1.at[:, 0:2].set(p["wc"])
    wh1 = wh1.at[:, LANE:LANE + H2].set(p["wp1"])
    wh1 = wh1.at[:, LANE + H2:].set(p["ww1"])
    bh1 = jnp.zeros((1, LANE + 2 * H2), f32)
    bh1 = bh1.at[:, 0:2].set(p["bc"])
    bh1 = bh1.at[:, LANE:LANE + H2].set(p["bp1"])
    bh1 = bh1.at[:, LANE + H2:].set(p["bw1"])

    # fused head #2: (4H, LANE); rows 0:2H -> pseudo fc2 (cols 2:4),
    #                            rows 2H:4H -> worst fc3 (cols 4:6)
    wh2 = jnp.zeros((2 * H2, LANE), bf16)
    wh2 = wh2.at[0:H2, 2:4].set(p["wp2"])
    wh2 = wh2.at[H2:, 4:6].set(p["ww3"])
    bh2 = jnp.zeros((1, LANE), f32)
    bh2 = bh2.at[:, 2:4].set(p["bp2"])
    bh2 = bh2.at[:, 4:6].set(p["bw3"])

    return {
        "w1": p["w1"], "b1": p["b1"],
        "wf1": p["wf1"], "bf1": p["bf1"],
        "wf2": p["wf2"], "bf2": p["bf2"],
        "wh1": wh1, "bh1": bh1,
        "ww2": p["ww2"], "bw2": p["bw2"],
        "wh2": wh2, "bh2": bh2,
    }


def metric_learning_forward(x, fused, *, block_b=128):
    """Forward pass: returns (y_a, h_a, pseudo_out, worst_out)."""
    B, input_dim = x.shape
    H = fused["w1"].shape[1]

    TB = block_b                      # batch tile (multiple of 8)
    num_blocks = pl.cdiv(B, TB)
    B_pad = num_blocks * TB

    x_bf = x.astype(jnp.bfloat16)
    if B_pad != B:
        x_bf = jnp.pad(x_bf, ((0, B_pad - B), (0, 0)))

    args = (
        x_bf,
        fused["w1"], fused["b1"],
        fused["wf1"], fused["bf1"], fused["wf2"], fused["bf2"],
        fused["wh1"], fused["bh1"],
        fused["ww2"], fused["bw2"],
        fused["wh2"], fused["bh2"],
    )

    batch_spec = lambda d: pl.BlockSpec((TB, d), lambda i: (i, 0))
    # weights / biases: full-array blocks, constant index map -> VMEM-resident
    const_spec = lambda a: pl.BlockSpec(a.shape, lambda i: (0, 0))

    in_specs = [batch_spec(input_dim)] + [const_spec(a) for a in args[1:]]
    out_specs = [batch_spec(H), batch_spec(LANE)]
    out_shapes = (
        jax.ShapeDtypeStruct((B_pad, H), jnp.float32),     # h_a
        jax.ShapeDtypeStruct((B_pad, LANE), jnp.float32),  # packed y|pseudo|worst
    )

    h_a, slab = pl.pallas_call(
        _mlm_kernel,
        grid=(num_blocks,),
        in_specs=in_specs,
        out_specs=out_specs,
        out_shape=out_shapes,
        compiler_params=pltpu.CompilerParams(
            dimension_semantics=("parallel",),   # megacore sharding on v7x
            # NOTE: default 32 MiB scoped VMEM is ample here; raise
            # vmem_limit_bytes (and K-tile the 2Hx2H weights) if H scales up.
        ),
    )(*args)

    h_a = h_a[:B]
    slab = slab[:B]
    return slab[:, 0:2], h_a, slab[:, 2:4], slab[:, 4:6]


def init_params(key, input_dim, hidden_dim):
    internal_dim = hidden_dim // 2
    keys = jax.random.split(key, 18)
    k = iter(keys)

    def w(shape, scale=0.05):
        return (scale * jax.random.normal(next(k), shape)).astype(jnp.bfloat16)

    def b(dim):
        # biases stored (1, dim) so they broadcast over the batch in-kernel
        return (0.01 * jax.random.normal(next(k), (1, dim))).astype(jnp.float32)

    return {
        "w1": w((input_dim, hidden_dim)), "b1": b(hidden_dim),
        "wf1": w((hidden_dim, internal_dim)), "bf1": b(internal_dim),
        "wf2": w((internal_dim, hidden_dim)), "bf2": b(hidden_dim),
        "wc": w((hidden_dim, 2)), "bc": b(2),
        "wp1": w((hidden_dim, 2 * hidden_dim)), "bp1": b(2 * hidden_dim),
        "wp2": w((2 * hidden_dim, 2)), "bp2": b(2),
        "ww1": w((hidden_dim, 2 * hidden_dim)), "bw1": b(2 * hidden_dim),
        "ww2": w((2 * hidden_dim, 2 * hidden_dim)), "bw2": b(2 * hidden_dim),
        "ww3": w((2 * hidden_dim, 2)), "bw3": b(2),
    }


def reference_forward(x, p):
    """Pure-JAX reference with the same bf16-compute / f32-accumulate recipe."""
    bf16, f32 = jnp.bfloat16, jnp.float32

    def lin(v, w, b):
        return jnp.dot(v.astype(bf16), w.astype(bf16),
                       preferred_element_type=f32) + b

    relu = lambda v: jnp.maximum(v, 0.0)
    h1 = relu(lin(x, p["w1"], p["b1"]))
    hf = relu(lin(h1, p["wf1"], p["bf1"]))
    h_a = relu(lin(hf, p["wf2"], p["bf2"]))
    y_a = lin(h_a, p["wc"], p["bc"])
    pp = relu(lin(h_a, p["wp1"], p["bp1"]))
    pseudo = lin(pp, p["wp2"], p["bp2"])
    w1 = relu(lin(h_a, p["ww1"], p["bw1"]))
    w2 = relu(lin(w1, p["ww2"], p["bw2"]))
    worst = lin(w2, p["ww3"], p["bw3"])
    return y_a, h_a, pseudo, worst


if __name__ == "__main__":
    # Shapes of ReVeal's out_head = MetricLearningModel(256, 128); B=256, TB=128
    # gives a 2-step pipelined batch grid.
    B, INPUT_DIM, HIDDEN_DIM = 256, 256, 128

    key = jax.random.PRNGKey(0)
    key_x, key_p = jax.random.split(key)
    x = jax.random.normal(key_x, (B, INPUT_DIM), dtype=jnp.float32)
    params = init_params(key_p, INPUT_DIM, HIDDEN_DIM)
    fused = prepare_params(params)

    outs = metric_learning_forward(x, fused, block_b=128)
    outs = jax.block_until_ready(outs)

    refs = reference_forward(x, params)
    for o, r in zip(outs, refs):
        np.testing.assert_allclose(np.asarray(o, dtype=np.float32),
                                   np.asarray(r, dtype=np.float32),
                                   rtol=1e-2, atol=1e-2)

    print("KERNEL_OK")
</pallas_src>

<mosaic_0001>
module attributes {stable_mosaic.version = 11 : i64} {
  func.func @_mlm_kernel(%arg0: i32, %arg1: memref<128x256xbf16, #tpu.memory_space<vmem>>, %arg2: memref<256x128xbf16, #tpu.memory_space<vmem>>, %arg3: memref<1x128xf32, #tpu.memory_space<vmem>>, %arg4: memref<128x64xbf16, #tpu.memory_space<vmem>>, %arg5: memref<1x64xf32, #tpu.memory_space<vmem>>, %arg6: memref<64x128xbf16, #tpu.memory_space<vmem>>, %arg7: memref<1x128xf32, #tpu.memory_space<vmem>>, %arg8: memref<128x640xbf16, #tpu.memory_space<vmem>>, %arg9: memref<1x640xf32, #tpu.memory_space<vmem>>, %arg10: memref<256x256xbf16, #tpu.memory_space<vmem>>, %arg11: memref<1x256xf32, #tpu.memory_space<vmem>>, %arg12: memref<512x128xbf16, #tpu.memory_space<vmem>>, %arg13: memref<1x128xf32, #tpu.memory_space<vmem>>, %arg14: memref<128x128xf32, #tpu.memory_space<vmem>>, %arg15: memref<128x128xf32, #tpu.memory_space<vmem>>) attributes {dimension_semantics = [#tpu.dimension_semantics<parallel>], iteration_bounds = array<i64: 2>, scalar_prefetch = 0 : i64, scratch_operands = 0 : i64, tpu.core_type = #tpu.core_type<tc>, window_params = [{transform_indices = @transform_0, window_bounds = array<i64: 128, 256>}, {pipeline_mode = #tpu.pipeline_mode<synchronous>, transform_indices = @transform_1, window_bounds = array<i64: 256, 128>}, {pipeline_mode = #tpu.pipeline_mode<synchronous>, transform_indices = @transform_2, window_bounds = array<i64: 1, 128>}, {pipeline_mode = #tpu.pipeline_mode<synchronous>, transform_indices = @transform_3, window_bounds = array<i64: 128, 64>}, {pipeline_mode = #tpu.pipeline_mode<synchronous>, transform_indices = @transform_4, window_bounds = array<i64: 1, 64>}, {pipeline_mode = #tpu.pipeline_mode<synchronous>, transform_indices = @transform_5, window_bounds = array<i64: 64, 128>}, {pipeline_mode = #tpu.pipeline_mode<synchronous>, transform_indices = @transform_6, window_bounds = array<i64: 1, 128>}, {pipeline_mode = #tpu.pipeline_mode<synchronous>, transform_indices = @transform_7, window_bounds = array<i64: 128, 640>}, {pipeline_mode = #tpu.pipeline_mode<synchronous>, transform_indices = @transform_8, window_bounds = array<i64: 1, 640>}, {pipeline_mode = #tpu.pipeline_mode<synchronous>, transform_indices = @transform_9, window_bounds = array<i64: 256, 256>}, {pipeline_mode = #tpu.pipeline_mode<synchronous>, transform_indices = @transform_10, window_bounds = array<i64: 1, 256>}, {pipeline_mode = #tpu.pipeline_mode<synchronous>, transform_indices = @transform_11, window_bounds = array<i64: 512, 128>}, {pipeline_mode = #tpu.pipeline_mode<synchronous>, transform_indices = @transform_12, window_bounds = array<i64: 1, 128>}, {transform_indices = @transform_13, window_bounds = array<i64: 128, 128>}, {transform_indices = @transform_14, window_bounds = array<i64: 128, 128>}]} {
    %c0 = arith.constant 0 : index
    %c0_0 = arith.constant 0 : index
    %0 = vector.load %arg1[%c0, %c0_0] : memref<128x256xbf16, #tpu.memory_space<vmem>>, vector<128x256xbf16>
    %c0_1 = arith.constant 0 : index
    %c0_2 = arith.constant 0 : index
    %1 = vector.load %arg2[%c0_1, %c0_2] : memref<256x128xbf16, #tpu.memory_space<vmem>>, vector<256x128xbf16>
    %cst = arith.constant dense<0.000000e+00> : vector<128x128xf32>
    %2 = tpu.matmul %0, %1, %cst {dimension_numbers = #tpu.dot_dimension_numbers<[1], [0], [0], [1], [0, 0, 1, 1], [], []>} : vector<128x256xbf16>, vector<256x128xbf16>, vector<128x128xf32> -> vector<128x128xf32>
    %c0_3 = arith.constant 0 : index
    %c0_4 = arith.constant 0 : index
    %3 = vector.load %arg3[%c0_3, %c0_4] : memref<1x128xf32, #tpu.memory_space<vmem>>, vector<1x128xf32>
    %4 = vector.broadcast %3 : vector<1x128xf32> to vector<128x128xf32>
    %5 = arith.addf %2, %4 : vector<128x128xf32>
    %cst_5 = arith.constant 0.000000e+00 : f32
    %6 = vector.broadcast %cst_5 : f32 to vector<128x128xf32>
    %7 = arith.maximumf %5, %6 : vector<128x128xf32>
    %8 = arith.truncf %7 : vector<128x128xf32> to vector<128x128xbf16>
    %c0_6 = arith.constant 0 : index
    %c0_7 = arith.constant 0 : index
    %9 = vector.load %arg4[%c0_6, %c0_7] : memref<128x64xbf16, #tpu.memory_space<vmem>>, vector<128x64xbf16>
    %cst_8 = arith.constant dense<0.000000e+00> : vector<128x64xf32>
    %10 = tpu.matmul %8, %9, %cst_8 {dimension_numbers = #tpu.dot_dimension_numbers<[1], [0], [0], [1], [0, 0, 1, 1], [], []>} : vector<128x128xbf16>, vector<128x64xbf16>, vector<128x64xf32> -> vector<128x64xf32>
    %c0_9 = arith.constant 0 : index
    %c0_10 = arith.constant 0 : index
    %11 = vector.load %arg5[%c0_9, %c0_10] : memref<1x64xf32, #tpu.memory_space<vmem>>, vector<1x64xf32>
    %12 = vector.broadcast %11 : vector<1x64xf32> to vector<128x64xf32>
    %13 = arith.addf %10, %12 : vector<128x64xf32>
    %cst_11 = arith.constant 0.000000e+00 : f32
    %14 = vector.broadcast %cst_11 : f32 to vector<128x64xf32>
    %15 = arith.maximumf %13, %14 : vector<128x64xf32>
    %16 = arith.truncf %15 : vector<128x64xf32> to vector<128x64xbf16>
    %c0_12 = arith.constant 0 : index
    %c0_13 = arith.constant 0 : index
    %17 = vector.load %arg6[%c0_12, %c0_13] : memref<64x128xbf16, #tpu.memory_space<vmem>>, vector<64x128xbf16>
    %cst_14 = arith.constant dense<0.000000e+00> : vector<128x128xf32>
    %18 = tpu.matmul %16, %17, %cst_14 {dimension_numbers = #tpu.dot_dimension_numbers<[1], [0], [0], [1], [0, 0, 1, 1], [], []>} : vector<128x64xbf16>, vector<64x128xbf16>, vector<128x128xf32> -> vector<128x128xf32>
    %c0_15 = arith.constant 0 : index
    %c0_16 = arith.constant 0 : index
    %19 = vector.load %arg7[%c0_15, %c0_16] : memref<1x128xf32, #tpu.memory_space<vmem>>, vector<1x128xf32>
    %20 = vector.broadcast %19 : vector<1x128xf32> to vector<128x128xf32>
    %21 = arith.addf %18, %20 : vector<128x128xf32>
    %cst_17 = arith.constant 0.000000e+00 : f32
    %22 = vector.broadcast %cst_17 : f32 to vector<128x128xf32>
    %23 = arith.maximumf %21, %22 : vector<128x128xf32>
    %c0_18 = arith.constant 0 : index
    %c0_19 = arith.constant 0 : index
    %24 = vector.load %arg14[%c0_18, %c0_19] : memref<128x128xf32, #tpu.memory_space<vmem>>, vector<128x128xf32>
    tpu.vector_store %arg14[%c0_18, %c0_19], %23 {strides = array<i32>} : memref<128x128xf32, #tpu.memory_space<vmem>>, vector<128x128xf32>,
    %25 = arith.truncf %23 : vector<128x128xf32> to vector<128x128xbf16>
    %c0_20 = arith.constant 0 : index
    %c0_21 = arith.constant 0 : index
    %26 = vector.load %arg8[%c0_20, %c0_21] : memref<128x640xbf16, #tpu.memory_space<vmem>>, vector<128x640xbf16>
    %cst_22 = arith.constant dense<0.000000e+00> : vector<128x640xf32>
    %27 = tpu.matmul %25, %26, %cst_22 {dimension_numbers = #tpu.dot_dimension_numbers<[1], [0], [0], [1], [0, 0, 1, 1], [], []>} : vector<128x128xbf16>, vector<128x640xbf16>, vector<128x640xf32> -> vector<128x640xf32>
    %c0_23 = arith.constant 0 : index
    %c0_24 = arith.constant 0 : index
    %28 = vector.load %arg9[%c0_23, %c0_24] : memref<1x640xf32, #tpu.memory_space<vmem>>, vector<1x640xf32>
    %29 = vector.broadcast %28 : vector<1x640xf32> to vector<128x640xf32>
    %30 = arith.addf %27, %29 : vector<128x640xf32>
    %31 = vector.extract_strided_slice %30 {offsets = [0, 0], sizes = [128, 128], strides = [1, 1]} : vector<128x640xf32> to vector<128x128xf32>
    %32 = vector.extract_strided_slice %30 {offsets = [0, 128], sizes = [128, 256], strides = [1, 1]} : vector<128x640xf32> to vector<128x256xf32>
    %cst_25 = arith.constant 0.000000e+00 : f32
    %33 = vector.broadcast %cst_25 : f32 to vector<128x256xf32>
    %34 = arith.maximumf %32, %33 : vector<128x256xf32>
    %35 = arith.truncf %34 : vector<128x256xf32> to vector<128x256xbf16>
    %36 = vector.extract_strided_slice %30 {offsets = [0, 384], sizes = [128, 256], strides = [1, 1]} : vector<128x640xf32> to vector<128x256xf32>
    %cst_26 = arith.constant 0.000000e+00 : f32
    %37 = vector.broadcast %cst_26 : f32 to vector<128x256xf32>
    %38 = arith.maximumf %36, %37 : vector<128x256xf32>
    %39 = arith.truncf %38 : vector<128x256xf32> to vector<128x256xbf16>
    %c0_27 = arith.constant 0 : index
    %c0_28 = arith.constant 0 : index
    %40 = vector.load %arg10[%c0_27, %c0_28] : memref<256x256xbf16, #tpu.memory_space<vmem>>, vector<256x256xbf16>
    %cst_29 = arith.constant dense<0.000000e+00> : vector<128x256xf32>
    %41 = tpu.matmul %39, %40, %cst_29 {dimension_numbers = #tpu.dot_dimension_numbers<[1], [0], [0], [1], [0, 0, 1, 1], [], []>} : vector<128x256xbf16>, vector<256x256xbf16>, vector<128x256xf32> -> vector<128x256xf32>
    %c0_30 = arith.constant 0 : index
    %c0_31 = arith.constant 0 : index
    %42 = vector.load %arg11[%c0_30, %c0_31] : memref<1x256xf32, #tpu.memory_space<vmem>>, vector<1x256xf32>
    %43 = vector.broadcast %42 : vector<1x256xf32> to vector<128x256xf32>
    %44 = arith.addf %41, %43 : vector<128x256xf32>
    %cst_32 = arith.constant 0.000000e+00 : f32
    %45 = vector.broadcast %cst_32 : f32 to vector<128x256xf32>
    %46 = arith.maximumf %44, %45 : vector<128x256xf32>
    %47 = arith.truncf %46 : vector<128x256xf32> to vector<128x256xbf16>
    %48 = tpu.concatenate %35, %47 in 1 : vector<128x256xbf16>, vector<128x256xbf16> -> vector<128x512xbf16>
    %c0_33 = arith.constant 0 : index
    %c0_34 = arith.constant 0 : index
    %49 = vector.load %arg12[%c0_33, %c0_34] : memref<512x128xbf16, #tpu.memory_space<vmem>>, vector<512x128xbf16>
    %cst_35 = arith.constant dense<0.000000e+00> : vector<128x128xf32>
    %50 = tpu.matmul %48, %49, %cst_35 {dimension_numbers = #tpu.dot_dimension_numbers<[1], [0], [0], [1], [0, 0, 1, 1], [], []>} : vector<128x512xbf16>, vector<512x128xbf16>, vector<128x128xf32> -> vector<128x128xf32>
    %c0_36 = arith.constant 0 : index
    %c0_37 = arith.constant 0 : index
    %51 = vector.load %arg13[%c0_36, %c0_37] : memref<1x128xf32, #tpu.memory_space<vmem>>, vector<1x128xf32>
    %52 = vector.broadcast %51 : vector<1x128xf32> to vector<128x128xf32>
    %53 = arith.addf %50, %52 : vector<128x128xf32>
    %54 = arith.addf %31, %53 : vector<128x128xf32>
    %c0_38 = arith.constant 0 : index
    %c0_39 = arith.constant 0 : index
    %55 = vector.load %arg15[%c0_38, %c0_39] : memref<128x128xf32, #tpu.memory_space<vmem>>, vector<128x128xf32>
    tpu.vector_store %arg15[%c0_38, %c0_39], %54 {strides = array<i32>} : memref<128x128xf32, #tpu.memory_space<vmem>>, vector<128x128xf32>,
    return
  }
  func.func @transform_0(%arg0: i32) -> (i32, i32) {
    %c0_i32 = arith.constant 0 : i32
    %c0_i32_0 = arith.constant 0 : i32
    return %arg0, %c0_i32 : i32, i32
  }
  func.func @transform_1(%arg0: i32) -> (i32, i32) {
    %c0_i32 = arith.constant 0 : i32
    %c0_i32_0 = arith.constant 0 : i32
    %c0_i32_1 = arith.constant 0 : i32
    return %c0_i32, %c0_i32_0 : i32, i32
  }
  func.func @transform_2(%arg0: i32) -> (i32, i32) {
    %c0_i32 = arith.constant 0 : i32
    %c0_i32_0 = arith.constant 0 : i32
    %c0_i32_1 = arith.constant 0 : i32
    return %c0_i32, %c0_i32_0 : i32, i32
  }
  func.func @transform_3(%arg0: i32) -> (i32, i32) {
    %c0_i32 = arith.constant 0 : i32
    %c0_i32_0 = arith.constant 0 : i32
    %c0_i32_1 = arith.constant 0 : i32
    return %c0_i32, %c0_i32_0 : i32, i32
  }
  func.func @transform_4(%arg0: i32) -> (i32, i32) {
    %c0_i32 = arith.constant 0 : i32
    %c0_i32_0 = arith.constant 0 : i32
    %c0_i32_1 = arith.constant 0 : i32
    return %c0_i32, %c0_i32_0 : i32, i32
  }
  func.func @transform_5(%arg0: i32) -> (i32, i32) {
    %c0_i32 = arith.constant 0 : i32
    %c0_i32_0 = arith.constant 0 : i32
    %c0_i32_1 = arith.constant 0 : i32
    return %c0_i32, %c0_i32_0 : i32, i32
  }
  func.func @transform_6(%arg0: i32) -> (i32, i32) {
    %c0_i32 = arith.constant 0 : i32
    %c0_i32_0 = arith.constant 0 : i32
    %c0_i32_1 = arith.constant 0 : i32
    return %c0_i32, %c0_i32_0 : i32, i32
  }
  func.func @transform_7(%arg0: i32) -> (i32, i32) {
    %c0_i32 = arith.constant 0 : i32
    %c0_i32_0 = arith.constant 0 : i32
    %c0_i32_1 = arith.constant 0 : i32
    return %c0_i32, %c0_i32_0 : i32, i32
  }
  func.func @transform_8(%arg0: i32) -> (i32, i32) {
    %c0_i32 = arith.constant 0 : i32
    %c0_i32_0 = arith.constant 0 : i32
    %c0_i32_1 = arith.constant 0 : i32
    return %c0_i32, %c0_i32_0 : i32, i32
  }
  func.func @transform_9(%arg0: i32) -> (i32, i32) {
    %c0_i32 = arith.constant 0 : i32
    %c0_i32_0 = arith.constant 0 : i32
    %c0_i32_1 = arith.constant 0 : i32
    return %c0_i32, %c0_i32_0 : i32, i32
  }
  func.func @transform_10(%arg0: i32) -> (i32, i32) {
    %c0_i32 = arith.constant 0 : i32
    %c0_i32_0 = arith.constant 0 : i32
    %c0_i32_1 = arith.constant 0 : i32
    return %c0_i32, %c0_i32_0 : i32, i32
  }
  func.func @transform_11(%arg0: i32) -> (i32, i32) {
    %c0_i32 = arith.constant 0 : i32
    %c0_i32_0 = arith.constant 0 : i32
    %c0_i32_1 = arith.constant 0 : i32
    return %c0_i32, %c0_i32_0 : i32, i32
  }
  func.func @transform_12(%arg0: i32) -> (i32, i32) {
    %c0_i32 = arith.constant 0 : i32
    %c0_i32_0 = arith.constant 0 : i32
    %c0_i32_1 = arith.constant 0 : i32
    return %c0_i32, %c0_i32_0 : i32, i32
  }
  func.func @transform_13(%arg0: i32) -> (i32, i32) {
    %c0_i32 = arith.constant 0 : i32
    %c0_i32_0 = arith.constant 0 : i32
    return %arg0, %c0_i32 : i32, i32
  }
  func.func @transform_14(%arg0: i32) -> (i32, i32) {
    %c0_i32 = arith.constant 0 : i32
    %c0_i32_0 = arith.constant 0 : i32
    return %arg0, %c0_i32 : i32, i32
  }
}

</mosaic_0001>

<llo_original>
// kernel: tpu_custom_call.1
$region0: #{tpu_custom_call.1}
  #allocation0 [shape = 'u32[]', space=smem, size = 0x4, offset = 0x4, fixed_abs, tag = 'smem constant byte address 0x4 - core index']
  #allocation1 [shape = 'u32[144,128]{1,0:T(1,128)}', space=vmem, size = 0x12000, scoped, tag = 'internal scratch']
  %s0 = inlined_call_operand.hbm [shape: bf16[256,256], index: 0, kind: input, shape index: {}]
  %s1 = inlined_call_operand.hbm [shape: bf16[256,128], index: 1, kind: input, shape index: {}]
  %s2 = inlined_call_operand.vmem [shape: f32[1,128], index: 2, kind: input, shape index: {}]
  %s3 = inlined_call_operand.vmem [shape: bf16[128,64], index: 3, kind: input, shape index: {}]
  %s4 = inlined_call_operand.vmem [shape: f32[1,64], index: 4, kind: input, shape index: {}]
  %s5 = inlined_call_operand.vmem [shape: bf16[64,128], index: 5, kind: input, shape index: {}]
  %s6 = inlined_call_operand.vmem [shape: f32[1,128], index: 6, kind: input, shape index: {}]
  %s7 = inlined_call_operand.hbm [shape: bf16[128,640], index: 7, kind: input, shape index: {}]
  %s8 = inlined_call_operand.vmem [shape: f32[1,640], index: 8, kind: input, shape index: {}]
  %s9 = inlined_call_operand.hbm [shape: bf16[256,256], index: 9, kind: input, shape index: {}]
  %s10 = inlined_call_operand.vmem [shape: f32[1,256], index: 10, kind: input, shape index: {}]
  %s11 = inlined_call_operand.hbm [shape: bf16[512,128], index: 11, kind: input, shape index: {}]
  %s12 = inlined_call_operand.vmem [shape: f32[1,128], index: 12, kind: input, shape index: {}]
  %s13 = inlined_call_operand.hbm [shape: f32[256,128], index: 13, kind: output, shape index: {0}]
  %s14 = inlined_call_operand.hbm [shape: f32[256,128], index: 14, kind: output, shape index: {1}]
  %15 = xla_tuple %s13, %s14
  %s16 = sld [smem:[#allocation0]]
  $region113: #{tpu_custom_call.1} parent=0
    _
  %s18 = ssub.s32 1, %s16
  %s19 = scalar_select 0, %s18, %s16
  $region1: #{tpu_custom_call.1} parent=0
    #allocation2 [shape = 'u8[131072]{0}', space=vmem, size = 0x20000, scoped, tag = 'input window, operand 0']
    #allocation3 [shape = 's32[2]{0}', space=sflag, size = 0x8, scoped, tag = 'scoped memory for tpu_custom_call.1']
    #allocation4 [shape = 's32[2]{0}', space=sflag, size = 0x8, scoped, tag = 'scoped memory for tpu_custom_call.1']
    #allocation5 [shape = 'u8[65536]{0}', space=vmem, size = 0x10000, scoped, tag = 'input window, operand 1, single buffered']
    #allocation6 [shape = 's32[1]{0}', space=sflag, size = 0x4, scoped, tag = 'scoped memory for tpu_custom_call.1']
    #allocation7 [shape = 'u8[163840]{0}', space=vmem, size = 0x28000, scoped, tag = 'input window, operand 7, single buffered']
    #allocation8 [shape = 'u8[131072]{0}', space=vmem, size = 0x20000, scoped, tag = 'input window, operand 9, single buffered']
    #allocation9 [shape = 's32[1]{0}', space=sflag, size = 0x4, scoped, tag = 'scoped memory for tpu_custom_call.1']
    #allocation10 [shape = 'u8[131072]{0}', space=vmem, size = 0x20000, scoped, tag = 'input window, operand 11, single buffered']
    #allocation11 [shape = 'u8[131072]{0}', space=vmem, size = 0x20000, scoped, tag = 'output window, operand 0']
    #allocation12 [shape = 'u8[131072]{0}', space=vmem, size = 0x20000, scoped, tag = 'output window, operand 1']
    #allocation13 [shape = 's32[2]{0}', space=sflag, size = 0x8, scoped, tag = 'scoped memory for tpu_custom_call.1']
    %20 = vsyncpa [#allocation3], 0
    %s21 = scalar_lea.sflag [#allocation3], 1
    %22 = vsyncpa %s21, 0
    %23 = vsyncpa [#allocation6], 0
    %24 = vsyncpa [#allocation9], 0
    %25 = vsyncpa [#allocation4], 0
    %s26 = scalar_lea.sflag [#allocation4], 1
    %27 = vsyncpa %s26, 0
    %28 = vsyncpa [#allocation13], 0
    %s29 = scalar_lea.sflag [#allocation13], 1
    %30 = vsyncpa %s29, 0
    loop: start=0, step=1, limit=4
    $region2: #{tpu_custom_call.1} parent=1 // loop_pre_header
      _
    $region3: #{tpu_custom_call.1} parent=1 // loop_header
      %s32 = sphi 0, %s36
      %p33 = scmp.ge.s32.totalorder %s32, 4
      %s42 = sphi 0, %s44
      %s45 = sphi 0, %s42
      %s46 = sphi 0, %s45
      %s62 = sphi 0, %s46
      %s66 = sphi 0, %s66
      %s68 = sphi 0, %s66
      %s69 = sphi 0, %s68
      %s83 = sphi 0, %s69
      %s87 = sphi 0, %s87
      %s89 = sphi 0, %s87
      %s90 = sphi 0, %s89
      %s104 = sphi 0, %s90
      %s108 = sphi 0, %s108
      %s110 = sphi 0, %s108
      %s111 = sphi 0, %s110
      %s125 = sphi 0, %s111
      %s129 = sphi 0, %s129
      %s131 = sphi 0, %s129
      %s132 = sphi 0, %s131
      %s146 = sphi 0, %s132
      %s150 = sphi 0, %s150
      %s152 = sphi 0, %s150
      %s153 = sphi 0, %s152
      %s167 = sphi 0, %s153
      %s171 = sphi 0, %s171
      %s173 = sphi 0, %s171
      %s174 = sphi 0, %s173
      %s188 = sphi 0, %s174
      %s192 = sphi 0, %s192
      %s194 = sphi 0, %s192
      %s195 = sphi 0, %s194
      %s209 = sphi 0, %s195
      %s213 = sphi 0, %s213
      %s215 = sphi 0, %s213
      %s216 = sphi 0, %s215
      %s230 = sphi 0, %s216
      %s234 = sphi 0, %s234
      %s236 = sphi 0, %s234
      %s237 = sphi 0, %s236
      %s251 = sphi 0, %s237
      %s255 = sphi 0, %s255
      %s257 = sphi 0, %s255
      %s258 = sphi 0, %s257
      %s272 = sphi 0, %s258
      %s276 = sphi 0, %s276
      %s278 = sphi 0, %s276
      %s279 = sphi 0, %s278
      %s293 = sphi 0, %s279
      %s297 = sphi 0, %s297
      %s299 = sphi 0, %s297
      %s300 = sphi 0, %s299
      %s314 = sphi 0, %s300
      %s320 = sphi 0, %s322
      %s323 = sphi 0, %s320
      %s324 = sphi 0, %s323
      %s340 = sphi 0, %s324
      %s346 = sphi 0, %s348
      %s349 = sphi 0, %s346
      %s350 = sphi 0, %s349
      %s366 = sphi 0, %s350
    $region4: #{tpu_custom_call.1} parent=1 // loop_header_branch
      %35 = sbr.rel (%p33) target = $region8
    $region5: #{tpu_custom_call.1} parent=1 // loop_body
      %s37 = ssub.s32 %s32, 1
      %s38 = ssub.s32 %s32, 2
      %s39 = sadd.s32 %s32, 1
      %s40 = ssub.s32 %s32, %s39
      %p41 = scmp.eq.s32.totalorder %s40, 0
      %s43 = sadd.s32 %s42, 1
      %s44 = scalar_select %p41, %s42, %s43
      %p47 = pneg %p41
      %p48 = scmp.eq.s32.totalorder %s32, 1
      %p49 = por %p47, %p48
      %p50 = scmp.ne.s32.totalorder %s42, %s45
      %p51 = scmp.eq.s32.totalorder %s32, 0
      %p52 = por %p50, %p51
      %p53 = scmp.ne.s32.totalorder %s42, %s45
      %p54 = scmp.eq.s32.totalorder %s37, 1
      %p55 = por %p53, %p54
      %p56 = scmp.ne.s32.totalorder %s45, %s46
      %p57 = scmp.eq.s32.totalorder %s37, 0
      %p58 = por %p56, %p57
      %p59 = scmp.ne.s32.totalorder %s45, %s46
      %p60 = scmp.eq.s32.totalorder %s38, 1
      %p61 = por %p59, %p60
      %p63 = scmp.ne.s32.totalorder %s46, %s62
      %p64 = scmp.eq.s32.totalorder %s38, 0
      %p65 = por %p63, %p64
      %s67 = sadd.s32 %s66, 1
      %p70 = scmp.eq.s32.totalorder %s32, 1
      %p71 = scmp.ne.s32.totalorder %s66, %s68
      %p72 = scmp.eq.s32.totalorder %s32, 0
      %p73 = por %p71, %p72
      %p74 = scmp.ne.s32.totalorder %s66, %s68
      %p75 = scmp.eq.s32.totalorder %s37, 1
      %p76 = por %p74, %p75
      %p77 = scmp.ne.s32.totalorder %s68, %s69
      %p78 = scmp.eq.s32.totalorder %s37, 0
      %p79 = por %p77, %p78
      %p80 = scmp.ne.s32.totalorder %s68, %s69
      %p81 = scmp.eq.s32.totalorder %s38, 1
      %p82 = por %p80, %p81
      %p84 = scmp.ne.s32.totalorder %s69, %s83
      %p85 = scmp.eq.s32.totalorder %s38, 0
      %p86 = por %p84, %p85
      %s88 = sadd.s32 %s87, 1
      %p91 = scmp.eq.s32.totalorder %s32, 1
      %p92 = scmp.ne.s32.totalorder %s87, %s89
      %p93 = scmp.eq.s32.totalorder %s32, 0
      %p94 = por %p92, %p93
      %p95 = scmp.ne.s32.totalorder %s87, %s89
      %p96 = scmp.eq.s32.totalorder %s37, 1
      %p97 = por %p95, %p96
      %p98 = scmp.ne.s32.totalorder %s89, %s90
      %p99 = scmp.eq.s32.totalorder %s37, 0
      %p100 = por %p98, %p99
      %p101 = scmp.ne.s32.totalorder %s89, %s90
      %p102 = scmp.eq.s32.totalorder %s38, 1
      %p103 = por %p101, %p102
      %p105 = scmp.ne.s32.totalorder %s90, %s104
      %p106 = scmp.eq.s32.totalorder %s38, 0
      %p107 = por %p105, %p106
      %s109 = sadd.s32 %s108, 1
      %p112 = scmp.eq.s32.totalorder %s32, 1
      %p113 = scmp.ne.s32.totalorder %s108, %s110
      %p114 = scmp.eq.s32.totalorder %s32, 0
      %p115 = por %p113, %p114
      %p116 = scmp.ne.s32.totalorder %s108, %s110
      %p117 = scmp.eq.s32.totalorder %s37, 1
      %p118 = por %p116, %p117
      %p119 = scmp.ne.s32.totalorder %s110, %s111
      %p120 = scmp.eq.s32.totalorder %s37, 0
      %p121 = por %p119, %p120
      %p122 = scmp.ne.s32.totalorder %s110, %s111
      %p123 = scmp.eq.s32.totalorder %s38, 1
      %p124 = por %p122, %p123
      %p126 = scmp.ne.s32.totalorder %s111, %s125
      %p127 = scmp.eq.s32.totalorder %s38, 0
      %p128 = por %p126, %p127
      %s130 = sadd.s32 %s129, 1
      %p133 = scmp.eq.s32.totalorder %s32, 1
      %p134 = scmp.ne.s32.totalorder %s129, %s131
      %p135 = scmp.eq.s32.totalorder %s32, 0
      %p136 = por %p134, %p135
      %p137 = scmp.ne.s32.totalorder %s129, %s131
      %p138 = scmp.eq.s32.totalorder %s37, 1
      %p139 = por %p137, %p138
      %p140 = scmp.ne.s32.totalorder %s131, %s132
      %p141 = scmp.eq.s32.totalorder %s37, 0
      %p142 = por %p140, %p141
      %p143 = scmp.ne.s32.totalorder %s131, %s132
      %p144 = scmp.eq.s32.totalorder %s38, 1
      %p145 = por %p143, %p144
      %p147 = scmp.ne.s32.totalorder %s132, %s146
      %p148 = scmp.eq.s32.totalorder %s38, 0
      %p149 = por %p147, %p148
      %s151 = sadd.s32 %s150, 1
      %p154 = scmp.eq.s32.totalorder %s32, 1
      %p155 = scmp.ne.s32.totalorder %s150, %s152
      %p156 = scmp.eq.s32.totalorder %s32, 0
      %p157 = por %p155, %p156
      %p158 = scmp.ne.s32.totalorder %s150, %s152
      %p159 = scmp.eq.s32.totalorder %s37, 1
      %p160 = por %p158, %p159
      %p161 = scmp.ne.s32.totalorder %s152, %s153
      %p162 = scmp.eq.s32.totalorder %s37, 0
      %p163 = por %p161, %p162
      %p164 = scmp.ne.s32.totalorder %s152, %s153
      %p165 = scmp.eq.s32.totalorder %s38, 1
      %p166 = por %p164, %p165
      %p168 = scmp.ne.s32.totalorder %s153, %s167
      %p169 = scmp.eq.s32.totalorder %s38, 0
      %p170 = por %p168, %p169
      %s172 = sadd.s32 %s171, 1
      %p175 = scmp.eq.s32.totalorder %s32, 1
      %p176 = scmp.ne.s32.totalorder %s171, %s173
      %p177 = scmp.eq.s32.totalorder %s32, 0
      %p178 = por %p176, %p177
      %p179 = scmp.ne.s32.totalorder %s171, %s173
      %p180 = scmp.eq.s32.totalorder %s37, 1
      %p181 = por %p179, %p180
      %p182 = scmp.ne.s32.totalorder %s173, %s174
      %p183 = scmp.eq.s32.totalorder %s37, 0
      %p184 = por %p182, %p183
      %p185 = scmp.ne.s32.totalorder %s173, %s174
      %p186 = scmp.eq.s32.totalorder %s38, 1
      %p187 = por %p185, %p186
      %p189 = scmp.ne.s32.totalorder %s174, %s188
      %p190 = scmp.eq.s32.totalorder %s38, 0
      %p191 = por %p189, %p190
      %s193 = sadd.s32 %s192, 1
      %p196 = scmp.eq.s32.totalorder %s32, 1
      %p197 = scmp.ne.s32.totalorder %s192, %s194
      %p198 = scmp.eq.s32.totalorder %s32, 0
      %p199 = por %p197, %p198
      %p200 = scmp.ne.s32.totalorder %s192, %s194
      %p201 = scmp.eq.s32.totalorder %s37, 1
      %p202 = por %p200, %p201
      %p203 = scmp.ne.s32.totalorder %s194, %s195
      %p204 = scmp.eq.s32.totalorder %s37, 0
      %p205 = por %p203, %p204
      %p206 = scmp.ne.s32.totalorder %s194, %s195
      %p207 = scmp.eq.s32.totalorder %s38, 1
      %p208 = por %p206, %p207
      %p210 = scmp.ne.s32.totalorder %s195, %s209
      %p211 = scmp.eq.s32.totalorder %s38, 0
      %p212 = por %p210, %p211
      %s214 = sadd.s32 %s213, 1
      %p217 = scmp.eq.s32.totalorder %s32, 1
      %p218 = scmp.ne.s32.totalorder %s213, %s215
      %p219 = scmp.eq.s32.totalorder %s32, 0
      %p220 = por %p218, %p219
      %p221 = scmp.ne.s32.totalorder %s213, %s215
      %p222 = scmp.eq.s32.totalorder %s37, 1
      %p223 = por %p221, %p222
      %p224 = scmp.ne.s32.totalorder %s215, %s216
      %p225 = scmp.eq.s32.totalorder %s37, 0
      %p226 = por %p224, %p225
      %p227 = scmp.ne.s32.totalorder %s215, %s216
      %p228 = scmp.eq.s32.totalorder %s38, 1
      %p229 = por %p227, %p228
      %p231 = scmp.ne.s32.totalorder %s216, %s230
      %p232 = scmp.eq.s32.totalorder %s38, 0
      %p233 = por %p231, %p232
      %s235 = sadd.s32 %s234, 1
      %p238 = scmp.eq.s32.totalorder %s32, 1
      %p239 = scmp.ne.s32.totalorder %s234, %s236
      %p240 = scmp.eq.s32.totalorder %s32, 0
      %p241 = por %p239, %p240
      %p242 = scmp.ne.s32.totalorder %s234, %s236
      %p243 = scmp.eq.s32.totalorder %s37, 1
      %p244 = por %p242, %p243
      %p245 = scmp.ne.s32.totalorder %s236, %s237
      %p246 = scmp.eq.s32.totalorder %s37, 0
      %p247 = por %p245, %p246
      %p248 = scmp.ne.s32.totalorder %s236, %s237
      %p249 = scmp.eq.s32.totalorder %s38, 1
      %p250 = por %p248, %p249
      %p252 = scmp.ne.s32.totalorder %s237, %s251
      %p253 = scmp.eq.s32.totalorder %s38, 0
      %p254 = por %p252, %p253
      %s256 = sadd.s32 %s255, 1
      %p259 = scmp.eq.s32.totalorder %s32, 1
      %p260 = scmp.ne.s32.totalorder %s255, %s257
      %p261 = scmp.eq.s32.totalorder %s32, 0
      %p262 = por %p260, %p261
      %p263 = scmp.ne.s32.totalorder %s255, %s257
      %p264 = scmp.eq.s32.totalorder %s37, 1
      %p265 = por %p263, %p264
      %p266 = scmp.ne.s32.totalorder %s257, %s258
      %p267 = scmp.eq.s32.totalorder %s37, 0
      %p268 = por %p266, %p267
      %p269 = scmp.ne.s32.totalorder %s257, %s258
      %p270 = scmp.eq.s32.totalorder %s38, 1
      %p271 = por %p269, %p270
      %p273 = scmp.ne.s32.totalorder %s258, %s272
      %p274 = scmp.eq.s32.totalorder %s38, 0
      %p275 = por %p273, %p274
      %s277 = sadd.s32 %s276, 1
      %p280 = scmp.eq.s32.totalorder %s32, 1
      %p281 = scmp.ne.s32.totalorder %s276, %s278
      %p282 = scmp.eq.s32.totalorder %s32, 0
      %p283 = por %p281, %p282
      %p284 = scmp.ne.s32.totalorder %s276, %s278
      %p285 = scmp.eq.s32.totalorder %s37, 1
      %p286 = por %p284, %p285
      %p287 = scmp.ne.s32.totalorder %s278, %s279
      %p288 = scmp.eq.s32.totalorder %s37, 0
      %p289 = por %p287, %p288
      %p290 = scmp.ne.s32.totalorder %s278, %s279
      %p291 = scmp.eq.s32.totalorder %s38, 1
      %p292 = por %p290, %p291
      %p294 = scmp.ne.s32.totalorder %s279, %s293
      %p295 = scmp.eq.s32.totalorder %s38, 0
      %p296 = por %p294, %p295
      %s298 = sadd.s32 %s297, 1
      %p301 = scmp.eq.s32.totalorder %s32, 1
      %p302 = scmp.ne.s32.totalorder %s297, %s299
      %p303 = scmp.eq.s32.totalorder %s32, 0
      %p304 = por %p302, %p303
      %p305 = scmp.ne.s32.totalorder %s297, %s299
      %p306 = scmp.eq.s32.totalorder %s37, 1
      %p307 = por %p305, %p306
      %p308 = scmp.ne.s32.totalorder %s299, %s300
      %p309 = scmp.eq.s32.totalorder %s37, 0
      %p310 = por %p308, %p309
      %p311 = scmp.ne.s32.totalorder %s299, %s300
      %p312 = scmp.eq.s32.totalorder %s38, 1
      %p313 = por %p311, %p312
      %p315 = scmp.ne.s32.totalorder %s300, %s314
      %p316 = scmp.eq.s32.totalorder %s38, 0
      %p317 = por %p315, %p316
      %s318 = ssub.s32 %s32, %s39
      %p319 = scmp.eq.s32.totalorder %s318, 0
      %s321 = sadd.s32 %s320, 1
      %s322 = scalar_select %p319, %s320, %s321
      %p325 = pneg %p319
      %p326 = scmp.eq.s32.totalorder %s32, 1
      %p327 = por %p325, %p326
      %p328 = scmp.ne.s32.totalorder %s320, %s323
      %p329 = scmp.eq.s32.totalorder %s32, 0
      %p330 = por %p328, %p329
      %p331 = scmp.ne.s32.totalorder %s320, %s323
      %p332 = scmp.eq.s32.totalorder %s37, 1
      %p333 = por %p331, %p332
      %p334 = scmp.ne.s32.totalorder %s323, %s324
      %p335 = scmp.eq.s32.totalorder %s37, 0
      %p336 = por %p334, %p335
      %p337 = scmp.ne.s32.totalorder %s323, %s324
      %p338 = scmp.eq.s32.totalorder %s38, 1
      %p339 = por %p337, %p338
      %p341 = scmp.ne.s32.totalorder %s324, %s340
      %p342 = scmp.eq.s32.totalorder %s38, 0
      %p343 = por %p341, %p342
      %s344 = ssub.s32 %s32, %s39
      %p345 = scmp.eq.s32.totalorder %s344, 0
      %s347 = sadd.s32 %s346, 1
      %s348 = scalar_select %p345, %s346, %s347
      %p351 = pneg %p345
      %p352 = scmp.eq.s32.totalorder %s32, 1
      %p353 = por %p351, %p352
      %p354 = scmp.ne.s32.totalorder %s346, %s349
      %p355 = scmp.eq.s32.totalorder %s32, 0
      %p356 = por %p354, %p355
      %p357 = scmp.ne.s32.totalorder %s346, %s349
      %p358 = scmp.eq.s32.totalorder %s37, 1
      %p359 = por %p357, %p358
      %p360 = scmp.ne.s32.totalorder %s349, %s350
      %p361 = scmp.eq.s32.totalorder %s37, 0
      %p362 = por %p360, %p361
      %p363 = scmp.ne.s32.totalorder %s349, %s350
      %p364 = scmp.eq.s32.totalorder %s38, 1
      %p365 = por %p363, %p364
      %p367 = scmp.ne.s32.totalorder %s350, %s366
      %p368 = scmp.eq.s32.totalorder %s38, 0
      %p369 = por %p367, %p368
      %p370 = scmp.le.s32.totalorder 1, %s32
      %p371 = scmp.lt.s32.totalorder %s32, 3
      %p372 = pnand %p370, %p371
      %p373 = pneg %p372
      // Predicated region
      $region9: #{tpu_custom_call.1} parent=5 // pred_check
        _
      $region10: #{tpu_custom_call.1} parent=5 // pred_check_branch
        %375 = sbr.rel (%p372) target = $region12
      $region11: #{tpu_custom_call.1} parent=5 // pred_region
        %s376 = ssub.s32 %s32, 1
        // Predicated region
        $region13: #{tpu_custom_call.1} parent=11 // pred_check
          %p377 = pneg %p79
        $region14: #{tpu_custom_call.1} parent=11 // pred_check_branch
          %379 = sbr.rel (%p377) target = $region16
        $region15: #{tpu_custom_call.1} parent=11 // pred_region
          %s381 = ssub.s32 2048, 2048
          %382 = vsyncadd [#allocation6], %s381
          %s383 = sshll.u32 [#allocation5], 4
          %s384 = int_to_ptr.vmem [resolvable:$true] %s383
          %389 = dma.hbm_to_vmem [thread:$0]  %s1, 2048, %s384, [#allocation6], 64, 64, 4
        $region16: #{tpu_custom_call.1} parent=11 // pred_fallthru
          _
        // Predicated region
        $region17: #{tpu_custom_call.1} parent=11 // pred_check
          %p390 = pneg %p100
        $region18: #{tpu_custom_call.1} parent=11 // pred_check_branch
          %392 = sbr.rel (%p390) target = $region20
        $region19: #{tpu_custom_call.1} parent=11 // pred_region
          _
        $region20: #{tpu_custom_call.1} parent=11 // pred_fallthru
          _
        // Predicated region
        $region21: #{tpu_custom_call.1} parent=11 // pred_check
          %p393 = pneg %p121
        $region22: #{tpu_custom_call.1} parent=11 // pred_check_branch
          %395 = sbr.rel (%p393) target = $region24
        $region23: #{tpu_custom_call.1} parent=11 // pred_region
          _
        $region24: #{tpu_custom_call.1} parent=11 // pred_fallthru
          _
        // Predicated region
        $region25: #{tpu_custom_call.1} parent=11 // pred_check
          %p396 = pneg %p142
        $region26: #{tpu_custom_call.1} parent=11 // pred_check_branch
          %398 = sbr.rel (%p396) target = $region28
        $region27: #{tpu_custom_call.1} parent=11 // pred_region
          _
        $region28: #{tpu_custom_call.1} parent=11 // pred_fallthru
          _
        // Predicated region
        $region29: #{tpu_custom_call.1} parent=11 // pred_check
          %p399 = pneg %p163
        $region30: #{tpu_custom_call.1} parent=11 // pred_check_branch
          %401 = sbr.rel (%p399) target = $region32
        $region31: #{tpu_custom_call.1} parent=11 // pred_region
          _
        $region32: #{tpu_custom_call.1} parent=11 // pred_fallthru
          _
        // Predicated region
        $region33: #{tpu_custom_call.1} parent=11 // pred_check
          %p402 = pneg %p184
        $region34: #{tpu_custom_call.1} parent=11 // pred_check_branch
          %404 = sbr.rel (%p402) target = $region36
        $region35: #{tpu_custom_call.1} parent=11 // pred_region
          _
        $region36: #{tpu_custom_call.1} parent=11 // pred_fallthru
          _
        // Predicated region
        $region37: #{tpu_custom_call.1} parent=11 // pred_check
          %p405 = pneg %p205
        $region38: #{tpu_custom_call.1} parent=11 // pred_check_branch
          %407 = sbr.rel (%p405) target = $region40
        $region39: #{tpu_custom_call.1} parent=11 // pred_region
          %s409 = ssub.s32 5120, 5120
          %410 = vsyncadd [#allocation6], %s409
          %s411 = sshll.u32 [#allocation7], 4
          %s412 = int_to_ptr.vmem [resolvable:$true] %s411
          %417 = dma.hbm_to_vmem [thread:$0]  %s7, 5120, %s412, [#allocation6], 320, 320, 20
        $region40: #{tpu_custom_call.1} parent=11 // pred_fallthru
          _
        // Predicated region
        $region41: #{tpu_custom_call.1} parent=11 // pred_check
          %p418 = pneg %p226
        $region42: #{tpu_custom_call.1} parent=11 // pred_check_branch
          %420 = sbr.rel (%p418) target = $region44
        $region43: #{tpu_custom_call.1} parent=11 // pred_region
          _
        $region44: #{tpu_custom_call.1} parent=11 // pred_fallthru
          _
        // Predicated region
        $region45: #{tpu_custom_call.1} parent=11 // pred_check
          %p421 = pneg %p247
        $region46: #{tpu_custom_call.1} parent=11 // pred_check_branch
          %423 = sbr.rel (%p421) target = $region48
        $region47: #{tpu_custom_call.1} parent=11 // pred_region
          %s425 = ssub.s32 4096, 4096
          %426 = vsyncadd [#allocation9], %s425
          %s427 = sshll.u32 [#allocation8], 4
          %s428 = int_to_ptr.vmem [resolvable:$true] %s427
          %433 = dma.hbm_to_vmem [thread:$0]  %s9, 4096, %s428, [#allocation9], 128, 128, 8
        $region48: #{tpu_custom_call.1} parent=11 // pred_fallthru
          _
        // Predicated region
        $region49: #{tpu_custom_call.1} parent=11 // pred_check
          %p434 = pneg %p268
        $region50: #{tpu_custom_call.1} parent=11 // pred_check_branch
          %436 = sbr.rel (%p434) target = $region52
        $region51: #{tpu_custom_call.1} parent=11 // pred_region
          _
        $region52: #{tpu_custom_call.1} parent=11 // pred_fallthru
          _
        // Predicated region
        $region53: #{tpu_custom_call.1} parent=11 // pred_check
          %p437 = pneg %p289
        $region54: #{tpu_custom_call.1} parent=11 // pred_check_branch
          %439 = sbr.rel (%p437) target = $region56
        $region55: #{tpu_custom_call.1} parent=11 // pred_region
          %s441 = ssub.s32 4096, 4096
          %442 = vsyncadd [#allocation9], %s441
          %s443 = sshll.u32 [#allocation10], 4
          %s444 = int_to_ptr.vmem [resolvable:$true] %s443
          %449 = dma.hbm_to_vmem [thread:$0]  %s11, 4096, %s444, [#allocation9], 64, 64, 4
        $region56: #{tpu_custom_call.1} parent=11 // pred_fallthru
          _
        // Predicated region
        $region57: #{tpu_custom_call.1} parent=11 // pred_check
          %p450 = pneg %p310
        $region58: #{tpu_custom_call.1} parent=11 // pred_check_branch
          %452 = sbr.rel (%p450) target = $region60
        $region59: #{tpu_custom_call.1} parent=11 // pred_region
          _
        $region60: #{tpu_custom_call.1} parent=11 // pred_fallthru
          _
      $region12: #{tpu_custom_call.1} parent=5 // pred_fallthru
        _
      %p453 = scmp.lt.s32.totalorder %s32, 2
      // Predicated region
      $region61: #{tpu_custom_call.1} parent=5 // pred_check
        %p454 = pneg %p453
      $region62: #{tpu_custom_call.1} parent=5 // pred_check_branch
        %456 = sbr.rel (%p454) target = $region64
      $region63: #{tpu_custom_call.1} parent=5 // pred_region
        // Predicated region
        $region65: #{tpu_custom_call.1} parent=63 // pred_check
          %p457 = pneg %p52
        $region66: #{tpu_custom_call.1} parent=63 // pred_check_branch
          %459 = sbr.rel (%p457) target = $region68
        $region67: #{tpu_custom_call.1} parent=63 // pred_region
          %s460 = sand.u32 %s42, 1
          %s461 = scalar_lea.sflag [#allocation3], %s460
          %s462 = sand.u32 %s42, 1
          %s463 = smul.addr %s462, 128
          %s464 = scalar_lea.vmem [#allocation2], %s463
          %s465 = smul.u32 16, %s32
          %s467 = ssub.s32 2048, 2048
          %468 = vsyncadd %s461, %s467
          %s469 = smul.addr %s465, 2
          %s470 = smul.addr %s469, 64
          %s471 = scalar_lea.hbm %s0, %s470
          %s472 = sshll.u32 %s464, 4
          %s473 = int_to_ptr.vmem [resolvable:$true] %s472
          %478 = dma.hbm_to_vmem [thread:$0]  %s471, 2048, %s473, %s461, 128, 128, 8
        $region68: #{tpu_custom_call.1} parent=63 // pred_fallthru
          _
      $region64: #{tpu_custom_call.1} parent=5 // pred_fallthru
        _
      %p479 = scmp.le.s32.totalorder 1, %s32
      %p480 = scmp.lt.s32.totalorder %s32, 3
      %p481 = pnand %p479, %p480
      %p482 = pneg %p481
      // Predicated region
      $region69: #{tpu_custom_call.1} parent=5 // pred_check
        _
      $region70: #{tpu_custom_call.1} parent=5 // pred_check_branch
        %484 = sbr.rel (%p481) target = $region72
      $region71: #{tpu_custom_call.1} parent=5 // pred_region
        %s485 = ssub.s32 %s32, 1
        %s486 = sand.u32 %s45, 1
        %s487 = scalar_lea.sflag [#allocation3], %s486
        %s488 = sand.u32 %s45, 1
        %s489 = smul.addr %s488, 128
        %s490 = scalar_lea.vmem [#allocation2], %s489
        // Predicated region
        $region73: #{tpu_custom_call.1} parent=71 // pred_check
          %p491 = pneg %p58
        $region74: #{tpu_custom_call.1} parent=71 // pred_check_branch
          %493 = sbr.rel (%p491) target = $region76
        $region75: #{tpu_custom_call.1} parent=71 // pred_region
          %494 = dma.done %s487, 2048
        $region76: #{tpu_custom_call.1} parent=71 // pred_fallthru
          _
        // Predicated region
        $region77: #{tpu_custom_call.1} parent=71 // pred_check
          %p495 = pneg %p79
        $region78: #{tpu_custom_call.1} parent=71 // pred_check_branch
          %497 = sbr.rel (%p495) target = $region80
        $region79: #{tpu_custom_call.1} parent=71 // pred_region
          %498 = dma.done [#allocation6], 2048
        $region80: #{tpu_custom_call.1} parent=71 // pred_fallthru
          _
        // Predicated region
        $region81: #{tpu_custom_call.1} parent=71 // pred_check
          %p499 = pneg %p205
        $region82: #{tpu_custom_call.1} parent=71 // pred_check_branch
          %501 = sbr.rel (%p499) target = $region84
        $region83: #{tpu_custom_call.1} parent=71 // pred_region
          %502 = dma.done [#allocation6], 5120
        $region84: #{tpu_custom_call.1} parent=71 // pred_fallthru
          _
        // Predicated region
        $region85: #{tpu_custom_call.1} parent=71 // pred_check
          %p503 = pneg %p247
        $region86: #{tpu_custom_call.1} parent=71 // pred_check_branch
          %505 = sbr.rel (%p503) target = $region88
        $region87: #{tpu_custom_call.1} parent=71 // pred_region
          %506 = dma.done [#allocation9], 4096
        $region88: #{tpu_custom_call.1} parent=71 // pred_fallthru
          _
        // Predicated region
        $region89: #{tpu_custom_call.1} parent=71 // pred_check
          %p507 = pneg %p289
        $region90: #{tpu_custom_call.1} parent=71 // pred_check_branch
          %509 = sbr.rel (%p507) target = $region92
        $region91: #{tpu_custom_call.1} parent=71 // pred_region
          %510 = dma.done [#allocation9], 4096
        $region92: #{tpu_custom_call.1} parent=71 // pred_fallthru
          _
        %s511 = sand.u32 %s45, 1
        %s512 = scalar_lea.sflag [#allocation3], %s511
        %s513 = sand.u32 %s45, 1
        %s514 = smul.addr %s513, 128
        %s515 = scalar_lea.vmem [#allocation2], %s514
        %p516 = pneg %p58
        %p517 = pneg %p55
        %p518 = pneg %p79
        %p519 = pneg %p76
        %p520 = pneg %p100
        %p521 = pneg %p97
        %p522 = pneg %p121
        %p523 = pneg %p118
        %p524 = pneg %p142
        %p525 = pneg %p139
        %p526 = pneg %p163
        %p527 = pneg %p160
        %p528 = pneg %p184
        %p529 = pneg %p181
        %p530 = pneg %p205
        %p531 = pneg %p202
        %p532 = pneg %p226
        %p533 = pneg %p223
        %p534 = pneg %p247
        %p535 = pneg %p244
        %p536 = pneg %p268
        %p537 = pneg %p265
        %p538 = pneg %p289
        %p539 = pneg %p286
        %p540 = pneg %p310
        %p541 = pneg %p307
        %p542 = pneg %p336
        %p543 = pneg %p333
        %s544 = sand.u32 %s323, 1
        %s545 = scalar_lea.sflag [#allocation4], %s544
        %s546 = sand.u32 %s323, 1
        %s547 = smul.addr %s546, 128
        %s548 = scalar_lea.vmem [#allocation11], %s547
        %p549 = pneg %p362
        %p550 = pneg %p359
        %s551 = sand.u32 %s349, 1
        %s552 = scalar_lea.sflag [#allocation13], %s551
        %s553 = sand.u32 %s349, 1
        %s554 = smul.addr %s553, 128
        %s555 = scalar_lea.vmem [#allocation12], %s554
        %s556 = smul.u32 16, %s37
        %s557 = smul.u32 16, %s37
        %s558 = smul.u32 16, %s37
        %v560 = vld [vmem:[%s490] sm:$0xff]
        %v561 = vld [vmem:[%s490 + $0x8] sm:$0xff]
        %v562 = vld [vmem:[%s490 + $0x10] sm:$0xff]
        %v563 = vld [vmem:[%s490 + $0x18] sm:$0xff]
        %v564 = vld [vmem:[%s490 + $0x20] sm:$0xff]
        %v565 = vld [vmem:[%s490 + $0x28] sm:$0xff]
        %v566 = vld [vmem:[%s490 + $0x30] sm:$0xff]
        %v567 = vld [vmem:[%s490 + $0x38] sm:$0xff]
        %v568 = vld [vmem:[%s490 + $0x40] sm:$0xff]
        %v569 = vld [vmem:[%s490 + $0x48] sm:$0xff]
        %v570 = vld [vmem:[%s490 + $0x50] sm:$0xff]
        %v571 = vld [vmem:[%s490 + $0x58] sm:$0xff]
        %v572 = vld [vmem:[%s490 + $0x60] sm:$0xff]
        %v573 = vld [vmem:[%s490 + $0x68] sm:$0xff]
        %v574 = vld [vmem:[%s490 + $0x70] sm:$0xff]
        %v575 = vld [vmem:[%s490 + $0x78] sm:$0xff]
        %v576 = vld [vmem:[#allocation5] sm:$0xf]
        %v577 = vld [vmem:[#allocation5 + $0x4] sm:$0xf]
        %v578 = vld [vmem:[#allocation5 + $0x8] sm:$0xf]
        %v579 = vld [vmem:[#allocation5 + $0xc] sm:$0xf]
        %v580 = vld [vmem:[#allocation5 + $0x10] sm:$0xf]
        %v581 = vld [vmem:[#allocation5 + $0x14] sm:$0xf]
        %v582 = vld [vmem:[#allocation5 + $0x18] sm:$0xf]
        %v583 = vld [vmem:[#allocation5 + $0x1c] sm:$0xf]
        %v584 = vld [vmem:[#allocation5 + $0x20] sm:$0xf]
        %v585 = vld [vmem:[#allocation5 + $0x24] sm:$0xf]
        %v586 = vld [vmem:[#allocation5 + $0x28] sm:$0xf]
        %v587 = vld [vmem:[#allocation5 + $0x2c] sm:$0xf]
        %v588 = vld [vmem:[#allocation5 + $0x30] sm:$0xf]
        %v589 = vld [vmem:[#allocation5 + $0x34] sm:$0xf]
        %v590 = vld [vmem:[#allocation5 + $0x38] sm:$0xf]
        %v591 = vld [vmem:[#allocation5 + $0x3c] sm:$0xf]
        %v592 = vld [vmem:[#allocation5 + $0x40] sm:$0xf]
        %v593 = vld [vmem:[#allocation5 + $0x44] sm:$0xf]
        %v594 = vld [vmem:[#allocation5 + $0x48] sm:$0xf]
        %v595 = vld [vmem:[#allocation5 + $0x4c] sm:$0xf]
        %v596 = vld [vmem:[#allocation5 + $0x50] sm:$0xf]
        %v597 = vld [vmem:[#allocation5 + $0x54] sm:$0xf]
        %v598 = vld [vmem:[#allocation5 + $0x58] sm:$0xf]
        %v599 = vld [vmem:[#allocation5 + $0x5c] sm:$0xf]
        %v600 = vld [vmem:[#allocation5 + $0x60] sm:$0xf]
        %v601 = vld [vmem:[#allocation5 + $0x64] sm:$0xf]
        %v602 = vld [vmem:[#allocation5 + $0x68] sm:$0xf]
        %v603 = vld [vmem:[#allocation5 + $0x6c] sm:$0xf]
        %v604 = vld [vmem:[#allocation5 + $0x70] sm:$0xf]
        %v605 = vld [vmem:[#allocation5 + $0x74] sm:$0xf]
        %v606 = vld [vmem:[#allocation5 + $0x78] sm:$0xf]
        %v607 = vld [vmem:[#allocation5 + $0x7c] sm:$0xf]
        %v608 = vld [vmem:[%s2] sm:$0x1]
        %v610 = vlaneseq
        %v611 = vshrl.u32 %v610, 7
        %v612 = vsub.s32 0, %v611
        %v613 = vrot.slane %v608, %v612
        %v631 = vunpack.c.l.b16 %v560
        %v632 = vunpack.c.h.b16 %v560
        %v633 = vunpack.c.l.b16 %v561
        %v634 = vunpack.c.h.b16 %v561
        %v635 = vunpack.c.l.b16 %v562
        %v636 = vunpack.c.h.b16 %v562
        %v637 = vunpack.c.l.b16 %v563
        %v638 = vunpack.c.h.b16 %v563
        %v639 = vunpack.c.l.b16 %v564
        %v640 = vunpack.c.h.b16 %v564
        %v641 = vunpack.c.l.b16 %v565
        %v642 = vunpack.c.h.b16 %v565
        %v643 = vunpack.c.l.b16 %v566
        %v644 = vunpack.c.h.b16 %v566
        %v645 = vunpack.c.l.b16 %v567
        %v646 = vunpack.c.h.b16 %v567
        %v647 = vunpack.c.l.b16 %v568
        %v648 = vunpack.c.h.b16 %v568
        %v649 = vunpack.c.l.b16 %v569
        %v650 = vunpack.c.h.b16 %v569
        %v651 = vunpack.c.l.b16 %v570
        %v652 = vunpack.c.h.b16 %v570
        %v653 = vunpack.c.l.b16 %v571
        %v654 = vunpack.c.h.b16 %v571
        %v655 = vunpack.c.l.b16 %v572
        %v656 = vunpack.c.h.b16 %v572
        %v657 = vunpack.c.l.b16 %v573
        %v658 = vunpack.c.h.b16 %v573
        %v659 = vunpack.c.l.b16 %v574
        %v660 = vunpack.c.h.b16 %v574
        %v661 = vunpack.c.l.b16 %v575
        %v662 = vunpack.c.h.b16 %v575
        %v663 = vpack.c.b16 %v633, %v631
        %v664 = vpack.c.b16 %v634, %v632
        %v665 = vpack.c.b16 %v637, %v635
        %v666 = vpack.c.b16 %v638, %v636
        %v667 = vpack.c.b16 %v641, %v639
        %v668 = vpack.c.b16 %v642, %v640
        %v669 = vpack.c.b16 %v645, %v643
        %v670 = vpack.c.b16 %v646, %v644
        %v671 = vpack.c.b16 %v649, %v647
        %v672 = vpack.c.b16 %v650, %v648
        %v673 = vpack.c.b16 %v653, %v651
        %v674 = vpack.c.b16 %v654, %v652
        %v675 = vpack.c.b16 %v657, %v655
        %v676 = vpack.c.b16 %v658, %v656
        %v677 = vpack.c.b16 %v661, %v659
        %v678 = vpack.c.b16 %v662, %v660
        %v727 = vunpack.c.l.b16 %v576
        %v728 = vunpack.c.l.b16 %v577
        %v729 = vunpack.c.l.b16 %v578
        %v730 = vunpack.c.l.b16 %v579
        %v731 = vunpack.c.l.b16 %v580
        %v732 = vunpack.c.l.b16 %v581
        %v733 = vunpack.c.l.b16 %v582
        %v734 = vunpack.c.l.b16 %v583
        %v735 = vunpack.c.l.b16 %v584
        %v736 = vunpack.c.l.b16 %v585
        %v737 = vunpack.c.l.b16 %v586
        %v738 = vunpack.c.l.b16 %v587
        %v739 = vunpack.c.l.b16 %v588
        %v740 = vunpack.c.l.b16 %v589
        %v741 = vunpack.c.l.b16 %v590
        %v742 = vunpack.c.l.b16 %v591
        %v743 = vunpack.c.l.b16 %v592
        %v744 = vunpack.c.l.b16 %v593
        %v745 = vunpack.c.l.b16 %v594
        %v746 = vunpack.c.l.b16 %v595
        %v747 = vunpack.c.l.b16 %v596
        %v748 = vunpack.c.l.b16 %v597
        %v749 = vunpack.c.l.b16 %v598
        %v750 = vunpack.c.l.b16 %v599
        %v751 = vunpack.c.l.b16 %v600
        %v752 = vunpack.c.l.b16 %v601
        %v753 = vunpack.c.l.b16 %v602
        %v754 = vunpack.c.l.b16 %v603
        %v755 = vunpack.c.l.b16 %v604
        %v756 = vunpack.c.l.b16 %v605
        %v757 = vunpack.c.l.b16 %v606
        %v758 = vunpack.c.l.b16 %v607
        %v759 = vpack.c.b16 %v728, %v727
        %v760 = vpack.c.b16 %v730, %v729
        %v761 = vpack.c.b16 %v732, %v731
        %v762 = vpack.c.b16 %v734, %v733
        %v763 = vpack.c.b16 %v736, %v735
        %v764 = vpack.c.b16 %v738, %v737
        %v765 = vpack.c.b16 %v740, %v739
        %v766 = vpack.c.b16 %v742, %v741
        %v767 = vpack.c.b16 %v744, %v743
        %v768 = vpack.c.b16 %v746, %v745
        %v769 = vpack.c.b16 %v748, %v747
        %v770 = vpack.c.b16 %v750, %v749
        %v771 = vpack.c.b16 %v752, %v751
        %v772 = vpack.c.b16 %v754, %v753
        %v773 = vpack.c.b16 %v756, %v755
        %v774 = vpack.c.b16 %v758, %v757
        %791 = vmatprep.subr.bf16.mxu0 0
        %792 = vmatpush1.bf16.msra.mxu0 %v759
        %793 = vmatprep.subr.bf16.mxu0 0
        %794 = vmatpush1.bf16.msra.mxu0 %v760
        %795 = vmatprep.subr.bf16.mxu0 0
        %796 = vmatpush1.bf16.msra.mxu0 %v761
        %797 = vmatprep.subr.bf16.mxu0 0
        %798 = vmatpush1.bf16.msra.mxu0 %v762
        %799 = vmatprep.subr.bf16.mxu0 0
        %800 = vmatpush1.bf16.msra.mxu0 %v763
        %801 = vmatprep.subr.bf16.mxu0 0
        %802 = vmatpush1.bf16.msra.mxu0 %v764
        %803 = vmatprep.subr.bf16.mxu0 0
        %804 = vmatpush1.bf16.msra.mxu0 %v765
        %805 = vmatprep.subr.bf16.mxu0 0
        %806 = vmatpush1.bf16.msra.mxu0 %v766
        %807 = vmatprep.subr.bf16.mxu0 0
        %808 = vmatpush1.bf16.msra.mxu0 %v767
        %809 = vmatprep.subr.bf16.mxu0 0
        %810 = vmatpush1.bf16.msra.mxu0 %v768
        %811 = vmatprep.subr.bf16.mxu0 0
        %812 = vmatpush1.bf16.msra.mxu0 %v769
        %813 = vmatprep.subr.bf16.mxu0 0
        %814 = vmatpush1.bf16.msra.mxu0 %v770
        %815 = vmatprep.subr.bf16.mxu0 0
        %816 = vmatpush1.bf16.msra.mxu0 %v771
        %817 = vmatprep.subr.bf16.mxu0 0
        %818 = vmatpush1.bf16.msra.mxu0 %v772
        %819 = vmatprep.subr.bf16.mxu0 0
        %820 = vmatpush1.bf16.msra.mxu0 %v773
        %821 = vmatprep.subr.bf16.mxu0 0
        %822 = vmatpush1.bf16.msra.mxu0 %v774
        %823 = vmatprep.mubr.bf16.mxu0 %v664
        %824 = vmatmul.mubr.bf16.gmra.mrb[0].mxu0 %v663
        %v825 = vpop.f32.mrb[0].mxu0
        %v826 = vadd.f32 %v613, %v825
        %v827 = vpop.f32.mrb[0].mxu0
        %v828 = vpop.f32.mrb[0].mxu0
        %v829 = vadd.f32 %v613, %v828
        %v830 = vpop.f32.mrb[0].mxu0
        %831 = vmatprep.mubr.bf16.mxu0 %v666
        %832 = vmatmul.mubr.bf16.gmra.mrb[0].mxu0 %v665
        %v833 = vpop.f32.mrb[0].mxu0
        %v834 = vadd.f32 %v613, %v833
        %v835 = vpop.f32.mrb[0].mxu0
        %v836 = vpop.f32.mrb[0].mxu0
        %v837 = vadd.f32 %v613, %v836
        %v838 = vpop.f32.mrb[0].mxu0
        %839 = vmatprep.mubr.bf16.mxu0 %v668
        %840 = vmatmul.mubr.bf16.gmra.mrb[0].mxu0 %v667
        %v841 = vpop.f32.mrb[0].mxu0
        %v842 = vadd.f32 %v613, %v841
        %v843 = vpop.f32.mrb[0].mxu0
        %v844 = vpop.f32.mrb[0].mxu0
        %v845 = vadd.f32 %v613, %v844
        %v846 = vpop.f32.mrb[0].mxu0
        %847 = vmatprep.mubr.bf16.mxu0 %v670
        %848 = vmatmul.mubr.bf16.gmra.mrb[0].mxu0 %v669
        %v849 = vpop.f32.mrb[0].mxu0
        %v850 = vadd.f32 %v613, %v849
        %v851 = vpop.f32.mrb[0].mxu0
        %v852 = vpop.f32.mrb[0].mxu0
        %v853 = vadd.f32 %v613, %v852
        %v854 = vpop.f32.mrb[0].mxu0
        %855 = vmatprep.mubr.bf16.mxu0 %v672
        %856 = vmatmul.mubr.bf16.gmra.mrb[0].mxu0 %v671
        %v857 = vpop.f32.mrb[0].mxu0
        %v858 = vadd.f32 %v613, %v857
        %v859 = vpop.f32.mrb[0].mxu0
        %v860 = vpop.f32.mrb[0].mxu0
        %v861 = vadd.f32 %v613, %v860
        %v862 = vpop.f32.mrb[0].mxu0
        %863 = vmatprep.mubr.bf16.mxu0 %v674
        %864 = vmatmul.mubr.bf16.gmra.mrb[0].mxu0 %v673
        %v865 = vpop.f32.mrb[0].mxu0
        %v866 = vadd.f32 %v613, %v865
        %v867 = vpop.f32.mrb[0].mxu0
        %v868 = vpop.f32.mrb[0].mxu0
        %v869 = vadd.f32 %v613, %v868
        %v870 = vpop.f32.mrb[0].mxu0
        %871 = vmatprep.mubr.bf16.mxu0 %v676
        %872 = vmatmul.mubr.bf16.gmra.mrb[0].mxu0 %v675
        %v873 = vpop.f32.mrb[0].mxu0
        %v874 = vadd.f32 %v613, %v873
        %v875 = vpop.f32.mrb[0].mxu0
        %v876 = vpop.f32.mrb[0].mxu0
        %v877 = vadd.f32 %v613, %v876
        %v878 = vpop.f32.mrb[0].mxu0
        %879 = vmatprep.mubr.bf16.mxu0 %v678
        %880 = vmatmul.mubr.bf16.gmra.mrb[0].mxu0 %v677
        %v881 = vpop.f32.mrb[0].mxu0
        %v882 = vadd.f32 %v613, %v881
        %v883 = vpop.f32.mrb[0].mxu0
        %v884 = vpop.f32.mrb[0].mxu0
        %v885 = vadd.f32 %v613, %v884
        %v886 = vpop.f32.mrb[0].mxu0
        %887 = vdwg.mxu0
        %v888 = vmax.f32 %v826, 0.0
        %v889 = vmax.f32 %v829, 0.0
        %v890 = vmax.f32 %v834, 0.0
        %v891 = vmax.f32 %v837, 0.0
        %v892 = vmax.f32 %v842, 0.0
        %v893 = vmax.f32 %v845, 0.0
        %v894 = vmax.f32 %v850, 0.0
        %v895 = vmax.f32 %v853, 0.0
        %v896 = vmax.f32 %v858, 0.0
        %v897 = vmax.f32 %v861, 0.0
        %v898 = vmax.f32 %v866, 0.0
        %v899 = vmax.f32 %v869, 0.0
        %v900 = vmax.f32 %v874, 0.0
        %v901 = vmax.f32 %v877, 0.0
        %v902 = vmax.f32 %v882, 0.0
        %v903 = vmax.f32 %v885, 0.0
        %v904 = vpack.c.bf16 %v889, %v888
        %v905 = vpack.c.bf16 %v891, %v890
        %v906 = vpack.c.bf16 %v893, %v892
        %v907 = vpack.c.bf16 %v895, %v894
        %v908 = vpack.c.bf16 %v897, %v896
        %v909 = vpack.c.bf16 %v899, %v898
        %v910 = vpack.c.bf16 %v901, %v900
        %v911 = vpack.c.bf16 %v903, %v902
        %v912 = vld [vmem:[%s3] sm:$0xf]
        %v913 = vld [vmem:[%s3 + $0x4] sm:$0xf]
        %v914 = vld [vmem:[%s3 + $0x8] sm:$0xf]
        %v915 = vld [vmem:[%s3 + $0xc] sm:$0xf]
        %v916 = vld [vmem:[%s3 + $0x10] sm:$0xf]
        %v917 = vld [vmem:[%s3 + $0x14] sm:$0xf]
        %v918 = vld [vmem:[%s3 + $0x18] sm:$0xf]
        %v919 = vld [vmem:[%s3 + $0x1c] sm:$0xf]
        %v920 = vld [vmem:[%s3 + $0x20] sm:$0xf]
        %v921 = vld [vmem:[%s3 + $0x24] sm:$0xf]
        %v922 = vld [vmem:[%s3 + $0x28] sm:$0xf]
        %v923 = vld [vmem:[%s3 + $0x2c] sm:$0xf]
        %v924 = vld [vmem:[%s3 + $0x30] sm:$0xf]
        %v925 = vld [vmem:[%s3 + $0x34] sm:$0xf]
        %v926 = vld [vmem:[%s3 + $0x38] sm:$0xf]
        %v927 = vld [vmem:[%s3 + $0x3c] sm:$0xf]
        %v928 = vld [vmem:[%s4] sm:$0x1]
        %v930 = vlaneseq
        %v931 = vshrl.u32 %v930, 7
        %v932 = vsub.s32 0, %v931
        %v933 = vrot.slane %v928, %v932
        %v951 = vunpack.c.l.b16 %v912
        %v952 = vunpack.c.l.b16 %v913
        %v953 = vunpack.c.l.b16 %v914
        %v954 = vunpack.c.l.b16 %v915
        %v955 = vunpack.c.l.b16 %v916
        %v956 = vunpack.c.l.b16 %v917
        %v957 = vunpack.c.l.b16 %v918
        %v958 = vunpack.c.l.b16 %v919
        %v959 = vunpack.c.l.b16 %v920
        %v960 = vunpack.c.l.b16 %v921
        %v961 = vunpack.c.l.b16 %v922
        %v962 = vunpack.c.l.b16 %v923
        %v963 = vunpack.c.l.b16 %v924
        %v964 = vunpack.c.l.b16 %v925
        %v965 = vunpack.c.l.b16 %v926
        %v966 = vunpack.c.l.b16 %v927
        %v967 = vpack.c.b16 %v952, %v951
        %v968 = vpack.c.b16 %v954, %v953
        %v969 = vpack.c.b16 %v956, %v955
        %v970 = vpack.c.b16 %v958, %v957
        %v971 = vpack.c.b16 %v960, %v959
        %v972 = vpack.c.b16 %v962, %v961
        %v973 = vpack.c.b16 %v964, %v963
        %v974 = vpack.c.b16 %v966, %v965
        %983 = vmatprep.subr.bf16.mxu0 0
        %984 = vmatpush1.bf16.msra.mxu0 %v967
        %985 = vmatprep.subr.bf16.mxu0 0
        %986 = vmatpush1.bf16.msra.mxu0 %v968
        %987 = vmatprep.subr.bf16.mxu0 0
        %988 = vmatpush1.bf16.msra.mxu0 %v969
        %989 = vmatprep.subr.bf16.mxu0 0
        %990 = vmatpush1.bf16.msra.mxu0 %v970
        %991 = vmatprep.subr.bf16.mxu0 0
        %992 = vmatpush1.bf16.msra.mxu0 %v971
        %993 = vmatprep.subr.bf16.mxu0 0
        %994 = vmatpush1.bf16.msra.mxu0 %v972
        %995 = vmatprep.subr.bf16.mxu0 0
        %996 = vmatpush1.bf16.msra.mxu0 %v973
        %997 = vmatprep.subr.bf16.mxu0 0
        %998 = vmatpush1.bf16.msra.mxu0 %v974
        %999 = vmatprep.subr.bf16.mxu0 0
        %1000 = vmatpush1.bf16.msra.mxu0 0
        %1001 = vmatprep.subr.bf16.mxu0 0
        %1002 = vmatpush1.bf16.msra.mxu0 0
        %1003 = vmatprep.subr.bf16.mxu0 0
        %1004 = vmatpush1.bf16.msra.mxu0 0
        %1005 = vmatprep.subr.bf16.mxu0 0
        %1006 = vmatpush1.bf16.msra.mxu0 0
        %1007 = vmatprep.subr.bf16.mxu0 0
        %1008 = vmatpush1.bf16.msra.mxu0 0
        %1009 = vmatprep.subr.bf16.mxu0 0
        %1010 = vmatpush1.bf16.msra.mxu0 0
        %1011 = vmatprep.subr.bf16.mxu0 0
        %1012 = vmatpush1.bf16.msra.mxu0 0
        %1013 = vmatprep.subr.bf16.mxu0 0
        %1014 = vmatpush1.bf16.msra.mxu0 0
        %1015 = vmatprep.mubr.bf16.mxu0 0
        %1016 = vmatmul.mubr.bf16.gmra.mrb[0].mxu0 %v904
        %v1017 = vpop.f32.mrb[0].mxu0
        %v1018 = vadd.f32 %v933, %v1017
        %v1019 = vpop.f32.mrb[0].mxu0
        %v1020 = vpop.f32.mrb[0].mxu0
        %v1021 = vadd.f32 %v933, %v1020
        %v1022 = vpop.f32.mrb[0].mxu0
        %1023 = vmatprep.mubr.bf16.mxu0 0
        %1024 = vmatmul.mubr.bf16.gmra.mrb[0].mxu0 %v905
        %v1025 = vpop.f32.mrb[0].mxu0
        %v1026 = vadd.f32 %v933, %v1025
        %v1027 = vpop.f32.mrb[0].mxu0
        %v1028 = vpop.f32.mrb[0].mxu0
        %v1029 = vadd.f32 %v933, %v1028
        %v1030 = vpop.f32.mrb[0].mxu0
        %1031 = vmatprep.mubr.bf16.mxu0 0
        %1032 = vmatmul.mubr.bf16.gmra.mrb[0].mxu0 %v906
        %v1033 = vpop.f32.mrb[0].mxu0
        %v1034 = vadd.f32 %v933, %v1033
        %v1035 = vpop.f32.mrb[0].mxu0
        %v1036 = vpop.f32.mrb[0].mxu0
        %v1037 = vadd.f32 %v933, %v1036
        %v1038 = vpop.f32.mrb[0].mxu0
        %1039 = vmatprep.mubr.bf16.mxu0 0
        %1040 = vmatmul.mubr.bf16.gmra.mrb[0].mxu0 %v907
        %v1041 = vpop.f32.mrb[0].mxu0
        %v1042 = vadd.f32 %v933, %v1041
        %v1043 = vpop.f32.mrb[0].mxu0
        %v1044 = vpop.f32.mrb[0].mxu0
        %v1045 = vadd.f32 %v933, %v1044
        %v1046 = vpop.f32.mrb[0].mxu0
        %1047 = vmatprep.mubr.bf16.mxu0 0
        %1048 = vmatmul.mubr.bf16.gmra.mrb[0].mxu0 %v908
        %v1049 = vpop.f32.mrb[0].mxu0
        %v1050 = vadd.f32 %v933, %v1049
        %v1051 = vpop.f32.mrb[0].mxu0
        %v1052 = vpop.f32.mrb[0].mxu0
        %v1053 = vadd.f32 %v933, %v1052
        %v1054 = vpop.f32.mrb[0].mxu0
        %1055 = vmatprep.mubr.bf16.mxu0 0
        %1056 = vmatmul.mubr.bf16.gmra.mrb[0].mxu0 %v909
        %v1057 = vpop.f32.mrb[0].mxu0
        %v1058 = vadd.f32 %v933, %v1057
        %v1059 = vpop.f32.mrb[0].mxu0
        %v1060 = vpop.f32.mrb[0].mxu0
        %v1061 = vadd.f32 %v933, %v1060
        %v1062 = vpop.f32.mrb[0].mxu0
        %1063 = vmatprep.mubr.bf16.mxu0 0
        %1064 = vmatmul.mubr.bf16.gmra.mrb[0].mxu0 %v910
        %v1065 = vpop.f32.mrb[0].mxu0
        %v1066 = vadd.f32 %v933, %v1065
        %v1067 = vpop.f32.mrb[0].mxu0
        %v1068 = vpop.f32.mrb[0].mxu0
        %v1069 = vadd.f32 %v933, %v1068
        %v1070 = vpop.f32.mrb[0].mxu0
        %1071 = vmatprep.mubr.bf16.mxu0 0
        %1072 = vmatmul.mubr.bf16.gmra.mrb[0].mxu0 %v911
        %v1073 = vpop.f32.mrb[0].mxu0
        %v1074 = vadd.f32 %v933, %v1073
        %v1075 = vpop.f32.mrb[0].mxu0
        %v1076 = vpop.f32.mrb[0].mxu0
        %v1077 = vadd.f32 %v933, %v1076
        %v1078 = vpop.f32.mrb[0].mxu0
        %1079 = vdwg.mxu0
        %v1080 = vmax.f32 %v1018, 0.0
        %v1081 = vmax.f32 %v1021, 0.0
        %v1082 = vmax.f32 %v1026, 0.0
        %v1083 = vmax.f32 %v1029, 0.0
        %v1084 = vmax.f32 %v1034, 0.0
        %v1085 = vmax.f32 %v1037, 0.0
        %v1086 = vmax.f32 %v1042, 0.0
        %v1087 = vmax.f32 %v1045, 0.0
        %v1088 = vmax.f32 %v1050, 0.0
        %v1089 = vmax.f32 %v1053, 0.0
        %v1090 = vmax.f32 %v1058, 0.0
        %v1091 = vmax.f32 %v1061, 0.0
        %v1092 = vmax.f32 %v1066, 0.0
        %v1093 = vmax.f32 %v1069, 0.0
        %v1094 = vmax.f32 %v1074, 0.0
        %v1095 = vmax.f32 %v1077, 0.0
        %v1096 = vpack.c.bf16 %v1081, %v1080
        %v1097 = vpack.c.bf16 %v1083, %v1082
        %v1098 = vpack.c.bf16 %v1085, %v1084
        %v1099 = vpack.c.bf16 %v1087, %v1086
        %v1100 = vpack.c.bf16 %v1089, %v1088
        %v1101 = vpack.c.bf16 %v1091, %v1090
        %v1102 = vpack.c.bf16 %v1093, %v1092
        %v1103 = vpack.c.bf16 %v1095, %v1094
        %v1104 = vld [vmem:[%s5] sm:$0xf]
        %v1105 = vld [vmem:[%s5 + $0x4] sm:$0xf]
        %v1106 = vld [vmem:[%s5 + $0x8] sm:$0xf]
        %v1107 = vld [vmem:[%s5 + $0xc] sm:$0xf]
        %v1108 = vld [vmem:[%s5 + $0x10] sm:$0xf]
        %v1109 = vld [vmem:[%s5 + $0x14] sm:$0xf]
        %v1110 = vld [vmem:[%s5 + $0x18] sm:$0xf]
        %v1111 = vld [vmem:[%s5 + $0x1c] sm:$0xf]
        %v1112 = vld [vmem:[%s6] sm:$0x1]
        %v1114 = vlaneseq
        %v1115 = vshrl.u32 %v1114, 7
        %v1116 = vsub.s32 0, %v1115
        %v1117 = vrot.slane %v1112, %v1116
        %v1127 = vunpack.c.l.b16 %v1104
        %v1128 = vunpack.c.l.b16 %v1105
        %v1129 = vunpack.c.l.b16 %v1106
        %v1130 = vunpack.c.l.b16 %v1107
        %v1131 = vunpack.c.l.b16 %v1108
        %v1132 = vunpack.c.l.b16 %v1109
        %v1133 = vunpack.c.l.b16 %v1110
        %v1134 = vunpack.c.l.b16 %v1111
        %v1135 = vpack.c.b16 %v1128, %v1127
        %v1136 = vpack.c.b16 %v1130, %v1129
        %v1137 = vpack.c.b16 %v1132, %v1131
        %v1138 = vpack.c.b16 %v1134, %v1133
        %vm1143 = vcmask 523264
        %v1145 = vsel %vm1143, %v1096, 0
        %v1148 = vsel %vm1143, %v1097, 0
        %v1151 = vsel %vm1143, %v1098, 0
        %v1154 = vsel %vm1143, %v1099, 0
        %v1157 = vsel %vm1143, %v1100, 0
        %v1160 = vsel %vm1143, %v1101, 0
        %v1163 = vsel %vm1143, %v1102, 0
        %v1166 = vsel %vm1143, %v1103, 0
        %1168 = vmatprep.subr.bf16.mxu0 0
        %1169 = vmatpush1.bf16.msra.mxu0 %v1135
        %1170 = vmatprep.subr.bf16.mxu0 0
        %1171 = vmatpush1.bf16.msra.mxu0 %v1136
        %1172 = vmatprep.subr.bf16.mxu0 0
        %1173 = vmatpush1.bf16.msra.mxu0 %v1137
        %1174 = vmatprep.subr.bf16.mxu0 0
        %1175 = vmatpush1.bf16.msra.mxu0 %v1138
        %1176 = vmatprep.subr.bf16.mxu0 0
        %1177 = vmatpush1.bf16.msra.mxu0 0
        %1178 = vmatprep.subr.bf16.mxu0 0
        %1179 = vmatpush1.bf16.msra.mxu0 0
        %1180 = vmatprep.subr.bf16.mxu0 0
        %1181 = vmatpush1.bf16.msra.mxu0 0
        %1182 = vmatprep.subr.bf16.mxu0 0
        %1183 = vmatpush1.bf16.msra.mxu0 0
        %1184 = vmatprep.subr.bf16.mxu0 0
        %1185 = vmatpush1.bf16.msra.mxu0 0
        %1186 = vmatprep.subr.bf16.mxu0 0
        %1187 = vmatpush1.bf16.msra.mxu0 0
        %1188 = vmatprep.subr.bf16.mxu0 0
        %1189 = vmatpush1.bf16.msra.mxu0 0
        %1190 = vmatprep.subr.bf16.mxu0 0
        %1191 = vmatpush1.bf16.msra.mxu0 0
        %1192 = vmatprep.subr.bf16.mxu0 0
        %1193 = vmatpush1.bf16.msra.mxu0 0
        %1194 = vmatprep.subr.bf16.mxu0 0
        %1195 = vmatpush1.bf16.msra.mxu0 0
        %1196 = vmatprep.subr.bf16.mxu0 0
        %1197 = vmatpush1.bf16.msra.mxu0 0
        %1198 = vmatprep.subr.bf16.mxu0 0
        %1199 = vmatpush1.bf16.msra.mxu0 0
        %1200 = vmatprep.mubr.bf16.mxu0 0
        %1201 = vmatmul.mubr.bf16.gmra.mrb[0].mxu0 %v1145
        %v1202 = vpop.f32.mrb[0].mxu0
        %v1203 = vadd.f32 %v1117, %v1202
        %v1204 = vpop.f32.mrb[0].mxu0
        %v1205 = vpop.f32.mrb[0].mxu0
        %v1206 = vadd.f32 %v1117, %v1205
        %v1207 = vpop.f32.mrb[0].mxu0
        %1208 = vmatprep.mubr.bf16.mxu0 0
        %1209 = vmatmul.mubr.bf16.gmra.mrb[0].mxu0 %v1148
        %v1210 = vpop.f32.mrb[0].mxu0
        %v1211 = vadd.f32 %v1117, %v1210
        %v1212 = vpop.f32.mrb[0].mxu0
        %v1213 = vpop.f32.mrb[0].mxu0
        %v1214 = vadd.f32 %v1117, %v1213
        %v1215 = vpop.f32.mrb[0].mxu0
        %1216 = vmatprep.mubr.bf16.mxu0 0
        %1217 = vmatmul.mubr.bf16.gmra.mrb[0].mxu0 %v1151
        %v1218 = vpop.f32.mrb[0].mxu0
        %v1219 = vadd.f32 %v1117, %v1218
        %v1220 = vpop.f32.mrb[0].mxu0
        %v1221 = vpop.f32.mrb[0].mxu0
        %v1222 = vadd.f32 %v1117, %v1221
        %v1223 = vpop.f32.mrb[0].mxu0
        %1224 = vmatprep.mubr.bf16.mxu0 0
        %1225 = vmatmul.mubr.bf16.gmra.mrb[0].mxu0 %v1154
        %v1226 = vpop.f32.mrb[0].mxu0
        %v1227 = vadd.f32 %v1117, %v1226
        %v1228 = vpop.f32.mrb[0].mxu0
        %v1229 = vpop.f32.mrb[0].mxu0
        %v1230 = vadd.f32 %v1117, %v1229
        %v1231 = vpop.f32.mrb[0].mxu0
        %1232 = vmatprep.mubr.bf16.mxu0 0
        %1233 = vmatmul.mubr.bf16.gmra.mrb[0].mxu0 %v1157
        %v1234 = vpop.f32.mrb[0].mxu0
        %v1235 = vadd.f32 %v1117, %v1234
        %v1236 = vpop.f32.mrb[0].mxu0
        %v1237 = vpop.f32.mrb[0].mxu0
        %v1238 = vadd.f32 %v1117, %v1237
        %v1239 = vpop.f32.mrb[0].mxu0
        %1240 = vmatprep.mubr.bf16.mxu0 0
        %1241 = vmatmul.mubr.bf16.gmra.mrb[0].mxu0 %v1160
        %v1242 = vpop.f32.mrb[0].mxu0
        %v1243 = vadd.f32 %v1117, %v1242
        %v1244 = vpop.f32.mrb[0].mxu0
        %v1245 = vpop.f32.mrb[0].mxu0
        %v1246 = vadd.f32 %v1117, %v1245
        %v1247 = vpop.f32.mrb[0].mxu0
        %1248 = vmatprep.mubr.bf16.mxu0 0
        %1249 = vmatmul.mubr.bf16.gmra.mrb[0].mxu0 %v1163
        %v1250 = vpop.f32.mrb[0].mxu0
        %v1251 = vadd.f32 %v1117, %v1250
        %v1252 = vpop.f32.mrb[0].mxu0
        %v1253 = vpop.f32.mrb[0].mxu0
        %v1254 = vadd.f32 %v1117, %v1253
        %v1255 = vpop.f32.mrb[0].mxu0
        %1256 = vmatprep.mubr.bf16.mxu0 0
        %1257 = vmatmul.mubr.bf16.gmra.mrb[0].mxu0 %v1166
        %v1258 = vpop.f32.mrb[0].mxu0
        %v1259 = vadd.f32 %v1117, %v1258
        %v1260 = vpop.f32.mrb[0].mxu0
        %v1261 = vpop.f32.mrb[0].mxu0
        %v1262 = vadd.f32 %v1117, %v1261
        %v1263 = vpop.f32.mrb[0].mxu0
        %1264 = vdwg.mxu0
        %v1265 = vmax.f32 %v1203, 0.0
        %v1266 = vmax.f32 %v1206, 0.0
        %v1267 = vmax.f32 %v1211, 0.0
        %v1268 = vmax.f32 %v1214, 0.0
        %v1269 = vmax.f32 %v1219, 0.0
        %v1270 = vmax.f32 %v1222, 0.0
        %v1271 = vmax.f32 %v1227, 0.0
        %v1272 = vmax.f32 %v1230, 0.0
        %v1273 = vmax.f32 %v1235, 0.0
        %v1274 = vmax.f32 %v1238, 0.0
        %v1275 = vmax.f32 %v1243, 0.0
        %v1276 = vmax.f32 %v1246, 0.0
        %v1277 = vmax.f32 %v1251, 0.0
        %v1278 = vmax.f32 %v1254, 0.0
        %v1279 = vmax.f32 %v1259, 0.0
        %v1280 = vmax.f32 %v1262, 0.0
        %1281 = vst [vmem:[%s548] sm:$0xff] %v1265
        %1282 = vst [vmem:[%s548 + $0x8] sm:$0xff] %v1266
        %1283 = vst [vmem:[%s548 + $0x10] sm:$0xff] %v1267
        %1284 = vst [vmem:[%s548 + $0x18] sm:$0xff] %v1268
        %1285 = vst [vmem:[%s548 + $0x20] sm:$0xff] %v1269
        %1286 = vst [vmem:[%s548 + $0x28] sm:$0xff] %v1270
        %1287 = vst [vmem:[%s548 + $0x30] sm:$0xff] %v1271
        %1288 = vst [vmem:[%s548 + $0x38] sm:$0xff] %v1272
        %1289 = vst [vmem:[%s548 + $0x40] sm:$0xff] %v1273
        %1290 = vst [vmem:[%s548 + $0x48] sm:$0xff] %v1274
        %1291 = vst [vmem:[%s548 + $0x50] sm:$0xff] %v1275
        %1292 = vst [vmem:[%s548 + $0x58] sm:$0xff] %v1276
        %1293 = vst [vmem:[%s548 + $0x60] sm:$0xff] %v1277
        %1294 = vst [vmem:[%s548 + $0x68] sm:$0xff] %v1278
        %1295 = vst [vmem:[%s548 + $0x70] sm:$0xff] %v1279
        %1296 = vst [vmem:[%s548 + $0x78] sm:$0xff] %v1280
        %v1297 = vpack.c.bf16 %v1266, %v1265
        %v1298 = vpack.c.bf16 %v1268, %v1267
        %v1299 = vpack.c.bf16 %v1270, %v1269
        %v1300 = vpack.c.bf16 %v1272, %v1271
        %v1301 = vpack.c.bf16 %v1274, %v1273
        %v1302 = vpack.c.bf16 %v1276, %v1275
        %v1303 = vpack.c.bf16 %v1278, %v1277
        %v1304 = vpack.c.bf16 %v1280, %v1279
        %v1305 = vld [vmem:[#allocation7] sm:$0xff]
        %v1306 = vld [vmem:[#allocation7 + $0x8] sm:$0xff]
        %v1307 = vld [vmem:[#allocation7 + $0x10] sm:$0xf]
        %v1308 = vld [vmem:[#allocation7 + $0x14] sm:$0xff]
        %v1309 = vld [vmem:[#allocation7 + $0x1c] sm:$0xff]
        %v1310 = vld [vmem:[#allocation7 + $0x24] sm:$0xf]
        %v1311 = vld [vmem:[#allocation7 + $0x28] sm:$0xff]
        %v1312 = vld [vmem:[#allocation7 + $0x30] sm:$0xff]
        %v1313 = vld [vmem:[#allocation7 + $0x38] sm:$0xf]
        %v1314 = vld [vmem:[#allocation7 + $0x3c] sm:$0xff]
        %v1315 = vld [vmem:[#allocation7 + $0x44] sm:$0xff]
        %v1316 = vld [vmem:[#allocation7 + $0x4c] sm:$0xf]
        %v1317 = vld [vmem:[#allocation7 + $0x50] sm:$0xff]
        %v1318 = vld [vmem:[#allocation7 + $0x58] sm:$0xff]
        %v1319 = vld [vmem:[#allocation7 + $0x60] sm:$0xf]
        %v1320 = vld [vmem:[#allocation7 + $0x64] sm:$0xff]
        %v1321 = vld [vmem:[#allocation7 + $0x6c] sm:$0xff]
        %v1322 = vld [vmem:[#allocation7 + $0x74] sm:$0xf]
        %v1323 = vld [vmem:[#allocation7 + $0x78] sm:$0xff]
        %v1324 = vld [vmem:[#allocation7 + $0x80] sm:$0xff]
        %v1325 = vld [vmem:[#allocation7 + $0x88] sm:$0xf]
        %v1326 = vld [vmem:[#allocation7 + $0x8c] sm:$0xff]
        %v1327 = vld [vmem:[#allocation7 + $0x94] sm:$0xff]
        %v1328 = vld [vmem:[#allocation7 + $0x9c] sm:$0xf]
        %v1329 = vld [vmem:[#allocation7 + $0xa0] sm:$0xff]
        %v1330 = vld [vmem:[#allocation7 + $0xa8] sm:$0xff]
        %v1331 = vld [vmem:[#allocation7 + $0xb0] sm:$0xf]
        %v1332 = vld [vmem:[#allocation7 + $0xb4] sm:$0xff]
        %v1333 = vld [vmem:[#allocation7 + $0xbc] sm:$0xff]
        %v1334 = vld [vmem:[#allocation7 + $0xc4] sm:$0xf]
        %v1335 = vld [vmem:[#allocation7 + $0xc8] sm:$0xff]
        %v1336 = vld [vmem:[#allocation7 + $0xd0] sm:$0xff]
        %v1337 = vld [vmem:[#allocation7 + $0xd8] sm:$0xf]
        %v1338 = vld [vmem:[#allocation7 + $0xdc] sm:$0xff]
        %v1339 = vld [vmem:[#allocation7 + $0xe4] sm:$0xff]
        %v1340 = vld [vmem:[#allocation7 + $0xec] sm:$0xf]
        %v1341 = vld [vmem:[#allocation7 + $0xf0] sm:$0xff]
        %v1342 = vld [vmem:[#allocation7 + $0xf8] sm:$0xff]
        %v1343 = vld [vmem:[#allocation7 + $0x100] sm:$0xf]
        %v1344 = vld [vmem:[#allocation7 + $0x104] sm:$0xff]
        %v1345 = vld [vmem:[#allocation7 + $0x10c] sm:$0xff]
        %v1346 = vld [vmem:[#allocation7 + $0x114] sm:$0xf]
        %v1347 = vld [vmem:[#allocation7 + $0x118] sm:$0xff]
        %v1348 = vld [vmem:[#allocation7 + $0x120] sm:$0xff]
        %v1349 = vld [vmem:[#allocation7 + $0x128] sm:$0xf]
        %v1350 = vld [vmem:[#allocation7 + $0x12c] sm:$0xff]
        %v1351 = vld [vmem:[#allocation7 + $0x134] sm:$0xff]
        %v1352 = vld [vmem:[#allocation7 + $0x13c] sm:$0xf]
        %v1353 = vld [vmem:[%s8] sm:$0x1f]
        %v1355 = vlaneseq
        %v1356 = vshrl.u32 %v1355, 7
        %v1357 = vsub.s32 0, %v1356
        %v1358 = vrot.slane %v1353, %v1357
        %v1359 = vlaneseq
        %v1360 = vshrl.u32 %v1359, 7
        %v1361 = vsub.s32 1, %v1360
        %v1362 = vrot.slane %v1353, %v1361
        %v1363 = vlaneseq
        %v1364 = vshrl.u32 %v1363, 7
        %v1365 = vsub.s32 2, %v1364
        %v1366 = vrot.slane %v1353, %v1365
        %v1367 = vlaneseq
        %v1368 = vshrl.u32 %v1367, 7
        %v1369 = vsub.s32 3, %v1368
        %v1370 = vrot.slane %v1353, %v1369
        %v1371 = vlaneseq
        %v1372 = vshrl.u32 %v1371, 7
        %v1373 = vsub.s32 4, %v1372
        %v1374 = vrot.slane %v1353, %v1373
        %v1428 = vunpack.c.l.b16 %v1305
        %v1429 = vunpack.c.h.b16 %v1305
        %v1430 = vunpack.c.l.b16 %v1306
        %v1431 = vunpack.c.h.b16 %v1306
        %v1432 = vunpack.c.l.b16 %v1307
        %v1433 = vunpack.c.l.b16 %v1308
        %v1434 = vunpack.c.h.b16 %v1308
        %v1435 = vunpack.c.l.b16 %v1309
        %v1436 = vunpack.c.h.b16 %v1309
        %v1437 = vunpack.c.l.b16 %v1310
        %v1438 = vunpack.c.l.b16 %v1311
        %v1439 = vunpack.c.h.b16 %v1311
        %v1440 = vunpack.c.l.b16 %v1312
        %v1441 = vunpack.c.h.b16 %v1312
        %v1442 = vunpack.c.l.b16 %v1313
        %v1443 = vunpack.c.l.b16 %v1314
        %v1444 = vunpack.c.h.b16 %v1314
        %v1445 = vunpack.c.l.b16 %v1315
        %v1446 = vunpack.c.h.b16 %v1315
        %v1447 = vunpack.c.l.b16 %v1316
        %v1448 = vunpack.c.l.b16 %v1317
        %v1449 = vunpack.c.h.b16 %v1317
        %v1450 = vunpack.c.l.b16 %v1318
        %v1451 = vunpack.c.h.b16 %v1318
        %v1452 = vunpack.c.l.b16 %v1319
        %v1453 = vunpack.c.l.b16 %v1320
        %v1454 = vunpack.c.h.b16 %v1320
        %v1455 = vunpack.c.l.b16 %v1321
        %v1456 = vunpack.c.h.b16 %v1321
        %v1457 = vunpack.c.l.b16 %v1322
        %v1458 = vunpack.c.l.b16 %v1323
        %v1459 = vunpack.c.h.b16 %v1323
        %v1460 = vunpack.c.l.b16 %v1324
        %v1461 = vunpack.c.h.b16 %v1324
        %v1462 = vunpack.c.l.b16 %v1325
        %v1463 = vunpack.c.l.b16 %v1326
        %v1464 = vunpack.c.h.b16 %v1326
        %v1465 = vunpack.c.l.b16 %v1327
        %v1466 = vunpack.c.h.b16 %v1327
        %v1467 = vunpack.c.l.b16 %v1328
        %v1468 = vunpack.c.l.b16 %v1329
        %v1469 = vunpack.c.h.b16 %v1329
        %v1470 = vunpack.c.l.b16 %v1330
        %v1471 = vunpack.c.h.b16 %v1330
        %v1472 = vunpack.c.l.b16 %v1331
        %v1473 = vunpack.c.l.b16 %v1332
        %v1474 = vunpack.c.h.b16 %v1332
        %v1475 = vunpack.c.l.b16 %v1333
        %v1476 = vunpack.c.h.b16 %v1333
        %v1477 = vunpack.c.l.b16 %v1334
        %v1478 = vunpack.c.l.b16 %v1335
        %v1479 = vunpack.c.h.b16 %v1335
        %v1480 = vunpack.c.l.b16 %v1336
        %v1481 = vunpack.c.h.b16 %v1336
        %v1482 = vunpack.c.l.b16 %v1337
        %v1483 = vunpack.c.l.b16 %v1338
        %v1484 = vunpack.c.h.b16 %v1338
        %v1485 = vunpack.c.l.b16 %v1339
        %v1486 = vunpack.c.h.b16 %v1339
        %v1487 = vunpack.c.l.b16 %v1340
        %v1488 = vunpack.c.l.b16 %v1341
        %v1489 = vunpack.c.h.b16 %v1341
        %v1490 = vunpack.c.l.b16 %v1342
        %v1491 = vunpack.c.h.b16 %v1342
        %v1492 = vunpack.c.l.b16 %v1343
        %v1493 = vunpack.c.l.b16 %v1344
        %v1494 = vunpack.c.h.b16 %v1344
        %v1495 = vunpack.c.l.b16 %v1345
        %v1496 = vunpack.c.h.b16 %v1345
        %v1497 = vunpack.c.l.b16 %v1346
        %v1498 = vunpack.c.l.b16 %v1347
        %v1499 = vunpack.c.h.b16 %v1347
        %v1500 = vunpack.c.l.b16 %v1348
        %v1501 = vunpack.c.h.b16 %v1348
        %v1502 = vunpack.c.l.b16 %v1349
        %v1503 = vunpack.c.l.b16 %v1350
        %v1504 = vunpack.c.h.b16 %v1350
        %v1505 = vunpack.c.l.b16 %v1351
        %v1506 = vunpack.c.h.b16 %v1351
        %v1507 = vunpack.c.l.b16 %v1352
        %v1508 = vpack.c.b16 %v1433, %v1428
        %v1509 = vpack.c.b16 %v1434, %v1429
        %v1510 = vpack.c.b16 %v1435, %v1430
        %v1511 = vpack.c.b16 %v1436, %v1431
        %v1512 = vpack.c.b16 %v1437, %v1432
        %v1513 = vpack.c.b16 %v1443, %v1438
        %v1514 = vpack.c.b16 %v1444, %v1439
        %v1515 = vpack.c.b16 %v1445, %v1440
        %v1516 = vpack.c.b16 %v1446, %v1441
        %v1517 = vpack.c.b16 %v1447, %v1442
        %v1518 = vpack.c.b16 %v1453, %v1448
        %v1519 = vpack.c.b16 %v1454, %v1449
        %v1520 = vpack.c.b16 %v1455, %v1450
        %v1521 = vpack.c.b16 %v1456, %v1451
        %v1522 = vpack.c.b16 %v1457, %v1452
        %v1523 = vpack.c.b16 %v1463, %v1458
        %v1524 = vpack.c.b16 %v1464, %v1459
        %v1525 = vpack.c.b16 %v1465, %v1460
        %v1526 = vpack.c.b16 %v1466, %v1461
        %v1527 = vpack.c.b16 %v1467, %v1462
        %v1528 = vpack.c.b16 %v1473, %v1468
        %v1529 = vpack.c.b16 %v1474, %v1469
        %v1530 = vpack.c.b16 %v1475, %v1470
        %v1531 = vpack.c.b16 %v1476, %v1471
        %v1532 = vpack.c.b16 %v1477, %v1472
        %v1533 = vpack.c.b16 %v1483, %v1478
        %v1534 = vpack.c.b16 %v1484, %v1479
        %v1535 = vpack.c.b16 %v1485, %v1480
        %v1536 = vpack.c.b16 %v1486, %v1481
        %v1537 = vpack.c.b16 %v1487, %v1482
        %v1538 = vpack.c.b16 %v1493, %v1488
        %v1539 = vpack.c.b16 %v1494, %v1489
        %v1540 = vpack.c.b16 %v1495, %v1490
        %v1541 = vpack.c.b16 %v1496, %v1491
        %v1542 = vpack.c.b16 %v1497, %v1492
        %v1543 = vpack.c.b16 %v1503, %v1498
        %v1544 = vpack.c.b16 %v1504, %v1499
        %v1545 = vpack.c.b16 %v1505, %v1500
        %v1546 = vpack.c.b16 %v1506, %v1501
        %v1547 = vpack.c.b16 %v1507, %v1502
        %1588 = vmatprep.subr.bf16.mxu0 %v1509
        %1589 = vmatpush1.bf16.msra.mxu0 %v1508
        %1590 = vmatprep.subr.bf16.mxu0 %v1514
        %1591 = vmatpush1.bf16.msra.mxu0 %v1513
        %1592 = vmatprep.subr.bf16.mxu0 %v1519
        %1593 = vmatpush1.bf16.msra.mxu0 %v1518
        %1594 = vmatprep.subr.bf16.mxu0 %v1524
        %1595 = vmatpush1.bf16.msra.mxu0 %v1523
        %1596 = vmatprep.subr.bf16.mxu0 %v1529
        %1597 = vmatpush1.bf16.msra.mxu0 %v1528
        %1598 = vmatprep.subr.bf16.mxu0 %v1534
        %1599 = vmatpush1.bf16.msra.mxu0 %v1533
        %1600 = vmatprep.subr.bf16.mxu0 %v1539
        %1601 = vmatpush1.bf16.msra.mxu0 %v1538
        %1602 = vmatprep.subr.bf16.mxu0 %v1544
        %1603 = vmatpush1.bf16.msra.mxu0 %v1543
        %1604 = vmatprep.subr.bf16.mxu0 0
        %1605 = vmatpush1.bf16.msra.mxu0 0
        %1606 = vmatprep.subr.bf16.mxu0 0
        %1607 = vmatpush1.bf16.msra.mxu0 0
        %1608 = vmatprep.subr.bf16.mxu0 0
        %1609 = vmatpush1.bf16.msra.mxu0 0
        %1610 = vmatprep.subr.bf16.mxu0 0
        %1611 = vmatpush1.bf16.msra.mxu0 0
        %1612 = vmatprep.subr.bf16.mxu0 0
        %1613 = vmatpush1.bf16.msra.mxu0 0
        %1614 = vmatprep.subr.bf16.mxu0 0
        %1615 = vmatpush1.bf16.msra.mxu0 0
        %1616 = vmatprep.subr.bf16.mxu0 0
        %1617 = vmatpush1.bf16.msra.mxu0 0
        %1618 = vmatprep.subr.bf16.mxu0 0
        %1619 = vmatpush1.bf16.msra.mxu0 0
        %1620 = vmatprep.mubr.bf16.mxu0 0
        %1621 = vmatmul.mubr.bf16.gmra.mrb[0].mxu0 %v1297
        %v1622 = vpop.f32.mrb[0].mxu0
        %v1623 = vadd.f32 %v1358, %v1622
        %v1624 = vpop.f32.mrb[0].mxu0
        %v1625 = vadd.f32 %v1362, %v1624
        %v1626 = vpop.f32.mrb[0].mxu0
        %v1627 = vadd.f32 %v1358, %v1626
        %v1628 = vpop.f32.mrb[0].mxu0
        %v1629 = vadd.f32 %v1362, %v1628
        %1630 = vmatprep.mubr.bf16.mxu0 0
        %1631 = vmatmul.mubr.bf16.gmra.mrb[0].mxu0 %v1298
        %v1632 = vpop.f32.mrb[0].mxu0
        %v1633 = vadd.f32 %v1358, %v1632
        %v1634 = vpop.f32.mrb[0].mxu0
        %v1635 = vadd.f32 %v1362, %v1634
        %v1636 = vpop.f32.mrb[0].mxu0
        %v1637 = vadd.f32 %v1358, %v1636
        %v1638 = vpop.f32.mrb[0].mxu0
        %v1639 = vadd.f32 %v1362, %v1638
        %1640 = vmatprep.mubr.bf16.mxu0 0
        %1641 = vmatmul.mubr.bf16.gmra.mrb[0].mxu0 %v1299
        %v1642 = vpop.f32.mrb[0].mxu0
        %v1643 = vadd.f32 %v1358, %v1642
        %v1644 = vpop.f32.mrb[0].mxu0
        %v1645 = vadd.f32 %v1362, %v1644
        %v1646 = vpop.f32.mrb[0].mxu0
        %v1647 = vadd.f32 %v1358, %v1646
        %v1648 = vpop.f32.mrb[0].mxu0
        %v1649 = vadd.f32 %v1362, %v1648
        %1650 = vmatprep.mubr.bf16.mxu0 0
        %1651 = vmatmul.mubr.bf16.gmra.mrb[0].mxu0 %v1300
        %v1652 = vpop.f32.mrb[0].mxu0
        %v1653 = vadd.f32 %v1358, %v1652
        %v1654 = vpop.f32.mrb[0].mxu0
        %v1655 = vadd.f32 %v1362, %v1654
        %v1656 = vpop.f32.mrb[0].mxu0
        %v1657 = vadd.f32 %v1358, %v1656
        %v1658 = vpop.f32.mrb[0].mxu0
        %v1659 = vadd.f32 %v1362, %v1658
        %1660 = vmatprep.mubr.bf16.mxu0 0
        %1661 = vmatmul.mubr.bf16.gmra.mrb[0].mxu0 %v1301
        %v1662 = vpop.f32.mrb[0].mxu0
        %v1663 = vadd.f32 %v1358, %v1662
        %v1664 = vpop.f32.mrb[0].mxu0
        %v1665 = vadd.f32 %v1362, %v1664
        %v1666 = vpop.f32.mrb[0].mxu0
        %v1667 = vadd.f32 %v1358, %v1666
        %v1668 = vpop.f32.mrb[0].mxu0
        %v1669 = vadd.f32 %v1362, %v1668
        %1670 = vmatprep.mubr.bf16.mxu0 0
        %1671 = vmatmul.mubr.bf16.gmra.mrb[0].mxu0 %v1302
        %v1672 = vpop.f32.mrb[0].mxu0
        %v1673 = vadd.f32 %v1358, %v1672
        %v1674 = vpop.f32.mrb[0].mxu0
        %v1675 = vadd.f32 %v1362, %v1674
        %v1676 = vpop.f32.mrb[0].mxu0
        %v1677 = vadd.f32 %v1358, %v1676
        %v1678 = vpop.f32.mrb[0].mxu0
        %v1679 = vadd.f32 %v1362, %v1678
        %1680 = vmatprep.mubr.bf16.mxu0 0
        %1681 = vmatmul.mubr.bf16.gmra.mrb[0].mxu0 %v1303
        %v1682 = vpop.f32.mrb[0].mxu0
        %v1683 = vadd.f32 %v1358, %v1682
        %v1684 = vpop.f32.mrb[0].mxu0
        %v1685 = vadd.f32 %v1362, %v1684
        %v1686 = vpop.f32.mrb[0].mxu0
        %v1687 = vadd.f32 %v1358, %v1686
        %v1688 = vpop.f32.mrb[0].mxu0
        %v1689 = vadd.f32 %v1362, %v1688
        %1690 = vmatprep.mubr.bf16.mxu0 0
        %1691 = vmatmul.mubr.bf16.gmra.mrb[0].mxu0 %v1304
        %v1692 = vpop.f32.mrb[0].mxu0
        %v1693 = vadd.f32 %v1358, %v1692
        %v1694 = vpop.f32.mrb[0].mxu0
        %v1695 = vadd.f32 %v1362, %v1694
        %v1696 = vpop.f32.mrb[0].mxu0
        %v1697 = vadd.f32 %v1358, %v1696
        %v1698 = vpop.f32.mrb[0].mxu0
        %v1699 = vadd.f32 %v1362, %v1698
        %1700 = vdwg.mxu0
        %1701 = vmatprep.subr.bf16.mxu0 %v1511
        %1702 = vmatpush1.bf16.msra.mxu0 %v1510
        %1703 = vmatprep.subr.bf16.mxu0 %v1516
        %1704 = vmatpush1.bf16.msra.mxu0 %v1515
        %1705 = vmatprep.subr.bf16.mxu0 %v1521
        %1706 = vmatpush1.bf16.msra.mxu0 %v1520
        %1707 = vmatprep.subr.bf16.mxu0 %v1526
        %1708 = vmatpush1.bf16.msra.mxu0 %v1525
        %1709 = vmatprep.subr.bf16.mxu0 %v1531
        %1710 = vmatpush1.bf16.msra.mxu0 %v1530
        %1711 = vmatprep.subr.bf16.mxu0 %v1536
        %1712 = vmatpush1.bf16.msra.mxu0 %v1535
        %1713 = vmatprep.subr.bf16.mxu0 %v1541
        %1714 = vmatpush1.bf16.msra.mxu0 %v1540
        %1715 = vmatprep.subr.bf16.mxu0 %v1546
        %1716 = vmatpush1.bf16.msra.mxu0 %v1545
        %1717 = vmatprep.subr.bf16.mxu0 0
        %1718 = vmatpush1.bf16.msra.mxu0 0
        %1719 = vmatprep.subr.bf16.mxu0 0
        %1720 = vmatpush1.bf16.msra.mxu0 0
        %1721 = vmatprep.subr.bf16.mxu0 0
        %1722 = vmatpush1.bf16.msra.mxu0 0
        %1723 = vmatprep.subr.bf16.mxu0 0
        %1724 = vmatpush1.bf16.msra.mxu0 0
        %1725 = vmatprep.subr.bf16.mxu0 0
        %1726 = vmatpush1.bf16.msra.mxu0 0
        %1727 = vmatprep.subr.bf16.mxu0 0
        %1728 = vmatpush1.bf16.msra.mxu0 0
        %1729 = vmatprep.subr.bf16.mxu0 0
        %1730 = vmatpush1.bf16.msra.mxu0 0
        %1731 = vmatprep.subr.bf16.mxu0 0
        %1732 = vmatpush1.bf16.msra.mxu0 0
        %1733 = vmatprep.mubr.bf16.mxu0 0
        %1734 = vmatmul.mubr.bf16.gmra.mrb[0].mxu0 %v1297
        %v1735 = vpop.f32.mrb[0].mxu0
        %v1736 = vadd.f32 %v1366, %v1735
        %v1737 = vpop.f32.mrb[0].mxu0
        %v1738 = vadd.f32 %v1370, %v1737
        %v1739 = vpop.f32.mrb[0].mxu0
        %v1740 = vadd.f32 %v1366, %v1739
        %v1741 = vpop.f32.mrb[0].mxu0
        %v1742 = vadd.f32 %v1370, %v1741
        %1743 = vmatprep.mubr.bf16.mxu0 0
        %1744 = vmatmul.mubr.bf16.gmra.mrb[0].mxu0 %v1298
        %v1745 = vpop.f32.mrb[0].mxu0
        %v1746 = vadd.f32 %v1366, %v1745
        %v1747 = vpop.f32.mrb[0].mxu0
        %v1748 = vadd.f32 %v1370, %v1747
        %v1749 = vpop.f32.mrb[0].mxu0
        %v1750 = vadd.f32 %v1366, %v1749
        %v1751 = vpop.f32.mrb[0].mxu0
        %v1752 = vadd.f32 %v1370, %v1751
        %1753 = vmatprep.mubr.bf16.mxu0 0
        %1754 = vmatmul.mubr.bf16.gmra.mrb[0].mxu0 %v1299
        %v1755 = vpop.f32.mrb[0].mxu0
        %v1756 = vadd.f32 %v1366, %v1755
        %v1757 = vpop.f32.mrb[0].mxu0
        %v1758 = vadd.f32 %v1370, %v1757
        %v1759 = vpop.f32.mrb[0].mxu0
        %v1760 = vadd.f32 %v1366, %v1759
        %v1761 = vpop.f32.mrb[0].mxu0
        %v1762 = vadd.f32 %v1370, %v1761
        %1763 = vmatprep.mubr.bf16.mxu0 0
        %1764 = vmatmul.mubr.bf16.gmra.mrb[0].mxu0 %v1300
        %v1765 = vpop.f32.mrb[0].mxu0
        %v1766 = vadd.f32 %v1366, %v1765
        %v1767 = vpop.f32.mrb[0].mxu0
        %v1768 = vadd.f32 %v1370, %v1767
        %v1769 = vpop.f32.mrb[0].mxu0
        %v1770 = vadd.f32 %v1366, %v1769
        %v1771 = vpop.f32.mrb[0].mxu0
        %v1772 = vadd.f32 %v1370, %v1771
        %1773 = vmatprep.mubr.bf16.mxu0 0
        %1774 = vmatmul.mubr.bf16.gmra.mrb[0].mxu0 %v1301
        %v1775 = vpop.f32.mrb[0].mxu0
        %v1776 = vadd.f32 %v1366, %v1775
        %v1777 = vpop.f32.mrb[0].mxu0
        %v1778 = vadd.f32 %v1370, %v1777
        %v1779 = vpop.f32.mrb[0].mxu0
        %v1780 = vadd.f32 %v1366, %v1779
        %v1781 = vpop.f32.mrb[0].mxu0
        %v1782 = vadd.f32 %v1370, %v1781
        %1783 = vmatprep.mubr.bf16.mxu0 0
        %1784 = vmatmul.mubr.bf16.gmra.mrb[0].mxu0 %v1302
        %v1785 = vpop.f32.mrb[0].mxu0
        %v1786 = vadd.f32 %v1366, %v1785
        %v1787 = vpop.f32.mrb[0].mxu0
        %v1788 = vadd.f32 %v1370, %v1787
        %v1789 = vpop.f32.mrb[0].mxu0
        %v1790 = vadd.f32 %v1366, %v1789
        %v1791 = vpop.f32.mrb[0].mxu0
        %v1792 = vadd.f32 %v1370, %v1791
        %1793 = vmatprep.mubr.bf16.mxu0 0
        %1794 = vmatmul.mubr.bf16.gmra.mrb[0].mxu0 %v1303
        %v1795 = vpop.f32.mrb[0].mxu0
        %v1796 = vadd.f32 %v1366, %v1795
        %v1797 = vpop.f32.mrb[0].mxu0
        %v1798 = vadd.f32 %v1370, %v1797
        %v1799 = vpop.f32.mrb[0].mxu0
        %v1800 = vadd.f32 %v1366, %v1799
        %v1801 = vpop.f32.mrb[0].mxu0
        %v1802 = vadd.f32 %v1370, %v1801
        %1803 = vmatprep.mubr.bf16.mxu0 0
        %1804 = vmatmul.mubr.bf16.gmra.mrb[0].mxu0 %v1304
        %v1805 = vpop.f32.mrb[0].mxu0
        %v1806 = vadd.f32 %v1366, %v1805
        %v1807 = vpop.f32.mrb[0].mxu0
        %v1808 = vadd.f32 %v1370, %v1807
        %v1809 = vpop.f32.mrb[0].mxu0
        %v1810 = vadd.f32 %v1366, %v1809
        %v1811 = vpop.f32.mrb[0].mxu0
        %v1812 = vadd.f32 %v1370, %v1811
        %1813 = vdwg.mxu0
        %1814 = vmatprep.subr.bf16.mxu0 0
        %1815 = vmatpush1.bf16.msra.mxu0 %v1512
        %1816 = vmatprep.subr.bf16.mxu0 0
        %1817 = vmatpush1.bf16.msra.mxu0 %v1517
        %1818 = vmatprep.subr.bf16.mxu0 0
        %1819 = vmatpush1.bf16.msra.mxu0 %v1522
        %1820 = vmatprep.subr.bf16.mxu0 0
        %1821 = vmatpush1.bf16.msra.mxu0 %v1527
        %1822 = vmatprep.subr.bf16.mxu0 0
        %1823 = vmatpush1.bf16.msra.mxu0 %v1532
        %1824 = vmatprep.subr.bf16.mxu0 0
        %1825 = vmatpush1.bf16.msra.mxu0 %v1537
        %1826 = vmatprep.subr.bf16.mxu0 0
        %1827 = vmatpush1.bf16.msra.mxu0 %v1542
        %1828 = vmatprep.subr.bf16.mxu0 0
        %1829 = vmatpush1.bf16.msra.mxu0 %v1547
        %1830 = vmatprep.subr.bf16.mxu0 0
        %1831 = vmatpush1.bf16.msra.mxu0 0
        %1832 = vmatprep.subr.bf16.mxu0 0
        %1833 = vmatpush1.bf16.msra.mxu0 0
        %1834 = vmatprep.subr.bf16.mxu0 0
        %1835 = vmatpush1.bf16.msra.mxu0 0
        %1836 = vmatprep.subr.bf16.mxu0 0
        %1837 = vmatpush1.bf16.msra.mxu0 0
        %1838 = vmatprep.subr.bf16.mxu0 0
        %1839 = vmatpush1.bf16.msra.mxu0 0
        %1840 = vmatprep.subr.bf16.mxu0 0
        %1841 = vmatpush1.bf16.msra.mxu0 0
        %1842 = vmatprep.subr.bf16.mxu0 0
        %1843 = vmatpush1.bf16.msra.mxu0 0
        %1844 = vmatprep.subr.bf16.mxu0 0
        %1845 = vmatpush1.bf16.msra.mxu0 0
        %1846 = vmatprep.mubr.bf16.mxu0 0
        %1847 = vmatmul.mubr.bf16.gmra.mrb[0].mxu0 %v1297
        %v1848 = vpop.f32.mrb[0].mxu0
        %v1849 = vadd.f32 %v1374, %v1848
        %v1850 = vpop.f32.mrb[0].mxu0
        %v1851 = vpop.f32.mrb[0].mxu0
        %v1852 = vadd.f32 %v1374, %v1851
        %v1853 = vpop.f32.mrb[0].mxu0
        %1854 = vmatprep.mubr.bf16.mxu0 0
        %1855 = vmatmul.mubr.bf16.gmra.mrb[0].mxu0 %v1298
        %v1856 = vpop.f32.mrb[0].mxu0
        %v1857 = vadd.f32 %v1374, %v1856
        %v1858 = vpop.f32.mrb[0].mxu0
        %v1859 = vpop.f32.mrb[0].mxu0
        %v1860 = vadd.f32 %v1374, %v1859
        %v1861 = vpop.f32.mrb[0].mxu0
        %1862 = vmatprep.mubr.bf16.mxu0 0
        %1863 = vmatmul.mubr.bf16.gmra.mrb[0].mxu0 %v1299
        %v1864 = vpop.f32.mrb[0].mxu0
        %v1865 = vadd.f32 %v1374, %v1864
        %v1866 = vpop.f32.mrb[0].mxu0
        %v1867 = vpop.f32.mrb[0].mxu0
        %v1868 = vadd.f32 %v1374, %v1867
        %v1869 = vpop.f32.mrb[0].mxu0
        %1870 = vmatprep.mubr.bf16.mxu0 0
        %1871 = vmatmul.mubr.bf16.gmra.mrb[0].mxu0 %v1300
        %v1872 = vpop.f32.mrb[0].mxu0
        %v1873 = vadd.f32 %v1374, %v1872
        %v1874 = vpop.f32.mrb[0].mxu0
        %v1875 = vpop.f32.mrb[0].mxu0
        %v1876 = vadd.f32 %v1374, %v1875
        %v1877 = vpop.f32.mrb[0].mxu0
        %1878 = vmatprep.mubr.bf16.mxu0 0
        %1879 = vmatmul.mubr.bf16.gmra.mrb[0].mxu0 %v1301
        %v1880 = vpop.f32.mrb[0].mxu0
        %v1881 = vadd.f32 %v1374, %v1880
        %v1882 = vpop.f32.mrb[0].mxu0
        %v1883 = vpop.f32.mrb[0].mxu0
        %v1884 = vadd.f32 %v1374, %v1883
        %v1885 = vpop.f32.mrb[0].mxu0
        %1886 = vmatprep.mubr.bf16.mxu0 0
        %1887 = vmatmul.mubr.bf16.gmra.mrb[0].mxu0 %v1302
        %v1888 = vpop.f32.mrb[0].mxu0
        %v1889 = vadd.f32 %v1374, %v1888
        %v1890 = vpop.f32.mrb[0].mxu0
        %v1891 = vpop.f32.mrb[0].mxu0
        %v1892 = vadd.f32 %v1374, %v1891
        %v1893 = vpop.f32.mrb[0].mxu0
        %1894 = vmatprep.mubr.bf16.mxu0 0
        %1895 = vmatmul.mubr.bf16.gmra.mrb[0].mxu0 %v1303
        %v1896 = vpop.f32.mrb[0].mxu0
        %v1897 = vadd.f32 %v1374, %v1896
        %v1898 = vpop.f32.mrb[0].mxu0
        %v1899 = vpop.f32.mrb[0].mxu0
        %v1900 = vadd.f32 %v1374, %v1899
        %v1901 = vpop.f32.mrb[0].mxu0
        %1902 = vmatprep.mubr.bf16.mxu0 0
        %1903 = vmatmul.mubr.bf16.gmra.mrb[0].mxu0 %v1304
        %v1904 = vpop.f32.mrb[0].mxu0
        %v1905 = vadd.f32 %v1374, %v1904
        %v1906 = vpop.f32.mrb[0].mxu0
        %v1907 = vpop.f32.mrb[0].mxu0
        %v1908 = vadd.f32 %v1374, %v1907
        %v1909 = vpop.f32.mrb[0].mxu0
        %1910 = vdwg.mxu0
        %v1911 = vmax.f32 %v1625, 0.0
        %v1912 = vmax.f32 %v1736, 0.0
        %v1913 = vmax.f32 %v1629, 0.0
        %v1914 = vmax.f32 %v1740, 0.0
        %v1915 = vmax.f32 %v1635, 0.0
        %v1916 = vmax.f32 %v1746, 0.0
        %v1917 = vmax.f32 %v1639, 0.0
        %v1918 = vmax.f32 %v1750, 0.0
        %v1919 = vmax.f32 %v1645, 0.0
        %v1920 = vmax.f32 %v1756, 0.0
        %v1921 = vmax.f32 %v1649, 0.0
        %v1922 = vmax.f32 %v1760, 0.0
        %v1923 = vmax.f32 %v1655, 0.0
        %v1924 = vmax.f32 %v1766, 0.0
        %v1925 = vmax.f32 %v1659, 0.0
        %v1926 = vmax.f32 %v1770, 0.0
        %v1927 = vmax.f32 %v1665, 0.0
        %v1928 = vmax.f32 %v1776, 0.0
        %v1929 = vmax.f32 %v1669, 0.0
        %v1930 = vmax.f32 %v1780, 0.0
        %v1931 = vmax.f32 %v1675, 0.0
        %v1932 = vmax.f32 %v1786, 0.0
        %v1933 = vmax.f32 %v1679, 0.0
        %v1934 = vmax.f32 %v1790, 0.0
        %v1935 = vmax.f32 %v1685, 0.0
        %v1936 = vmax.f32 %v1796, 0.0
        %v1937 = vmax.f32 %v1689, 0.0
        %v1938 = vmax.f32 %v1800, 0.0
        %v1939 = vmax.f32 %v1695, 0.0
        %v1940 = vmax.f32 %v1806, 0.0
        %v1941 = vmax.f32 %v1699, 0.0
        %v1942 = vmax.f32 %v1810, 0.0
        %v1943 = vpack.c.bf16 %v1913, %v1911
        %v1944 = vpack.c.bf16 %v1914, %v1912
        %v1945 = vpack.c.bf16 %v1917, %v1915
        %v1946 = vpack.c.bf16 %v1918, %v1916
        %v1947 = vpack.c.bf16 %v1921, %v1919
        %v1948 = vpack.c.bf16 %v1922, %v1920
        %v1949 = vpack.c.bf16 %v1925, %v1923
        %v1950 = vpack.c.bf16 %v1926, %v1924
        %v1951 = vpack.c.bf16 %v1929, %v1927
        %v1952 = vpack.c.bf16 %v1930, %v1928
        %v1953 = vpack.c.bf16 %v1933, %v1931
        %v1954 = vpack.c.bf16 %v1934, %v1932
        %v1955 = vpack.c.bf16 %v1937, %v1935
        %v1956 = vpack.c.bf16 %v1938, %v1936
        %v1957 = vpack.c.bf16 %v1941, %v1939
        %v1958 = vpack.c.bf16 %v1942, %v1940
        %v1959 = vmax.f32 %v1738, 0.0
        %v1960 = vmax.f32 %v1849, 0.0
        %v1961 = vmax.f32 %v1742, 0.0
        %v1962 = vmax.f32 %v1852, 0.0
        %v1963 = vmax.f32 %v1748, 0.0
        %v1964 = vmax.f32 %v1857, 0.0
        %v1965 = vmax.f32 %v1752, 0.0
        %v1966 = vmax.f32 %v1860, 0.0
        %v1967 = vmax.f32 %v1758, 0.0
        %v1968 = vmax.f32 %v1865, 0.0
        %v1969 = vmax.f32 %v1762, 0.0
        %v1970 = vmax.f32 %v1868, 0.0
        %v1971 = vmax.f32 %v1768, 0.0
        %v1972 = vmax.f32 %v1873, 0.0
        %v1973 = vmax.f32 %v1772, 0.0
        %v1974 = vmax.f32 %v1876, 0.0
        %v1975 = vmax.f32 %v1778, 0.0
        %v1976 = vmax.f32 %v1881, 0.0
        %v1977 = vmax.f32 %v1782, 0.0
        %v1978 = vmax.f32 %v1884, 0.0
        %v1979 = vmax.f32 %v1788, 0.0
        %v1980 = vmax.f32 %v1889, 0.0
        %v1981 = vmax.f32 %v1792, 0.0
        %v1982 = vmax.f32 %v1892, 0.0
        %v1983 = vmax.f32 %v1798, 0.0
        %v1984 = vmax.f32 %v1897, 0.0
        %v1985 = vmax.f32 %v1802, 0.0
        %v1986 = vmax.f32 %v1900, 0.0
        %v1987 = vmax.f32 %v1808, 0.0
        %v1988 = vmax.f32 %v1905, 0.0
        %v1989 = vmax.f32 %v1812, 0.0
        %v1990 = vmax.f32 %v1908, 0.0
        %v1991 = vpack.c.bf16 %v1961, %v1959
        %v1992 = vpack.c.bf16 %v1962, %v1960
        %v1993 = vpack.c.bf16 %v1965, %v1963
        %v1994 = vpack.c.bf16 %v1966, %v1964
        %v1995 = vpack.c.bf16 %v1969, %v1967
        %v1996 = vpack.c.bf16 %v1970, %v1968
        %v1997 = vpack.c.bf16 %v1973, %v1971
        %v1998 = vpack.c.bf16 %v1974, %v1972
        %v1999 = vpack.c.bf16 %v1977, %v1975
        %v2000 = vpack.c.bf16 %v1978, %v1976
        %v2001 = vpack.c.bf16 %v1981, %v1979
        %v2002 = vpack.c.bf16 %v1982, %v1980
        %v2003 = vpack.c.bf16 %v1985, %v1983
        %v2004 = vpack.c.bf16 %v1986, %v1984
        %v2005 = vpack.c.bf16 %v1989, %v1987
        %v2006 = vpack.c.bf16 %v1990, %v1988
        %v2007 = vld [vmem:[#allocation8] sm:$0xff]
        %v2008 = vld [vmem:[#allocation8 + $0x8] sm:$0xff]
        %v2009 = vld [vmem:[#allocation8 + $0x10] sm:$0xff]
        %v2010 = vld [vmem:[#allocation8 + $0x18] sm:$0xff]
        %v2011 = vld [vmem:[#allocation8 + $0x20] sm:$0xff]
        %v2012 = vld [vmem:[#allocation8 + $0x28] sm:$0xff]
        %v2013 = vld [vmem:[#allocation8 + $0x30] sm:$0xff]
        %v2014 = vld [vmem:[#allocation8 + $0x38] sm:$0xff]
        %v2015 = vld [vmem:[#allocation8 + $0x40] sm:$0xff]
        %v2016 = vld [vmem:[#allocation8 + $0x48] sm:$0xff]
        %v2017 = vld [vmem:[#allocation8 + $0x50] sm:$0xff]
        %v2018 = vld [vmem:[#allocation8 + $0x58] sm:$0xff]
        %v2019 = vld [vmem:[#allocation8 + $0x60] sm:$0xff]
        %v2020 = vld [vmem:[#allocation8 + $0x68] sm:$0xff]
        %v2021 = vld [vmem:[#allocation8 + $0x70] sm:$0xff]
        %v2022 = vld [vmem:[#allocation8 + $0x78] sm:$0xff]
        %v2023 = vld [vmem:[#allocation8 + $0x80] sm:$0xff]
        %v2024 = vld [vmem:[#allocation8 + $0x88] sm:$0xff]
        %v2025 = vld [vmem:[#allocation8 + $0x90] sm:$0xff]
        %v2026 = vld [vmem:[#allocation8 + $0x98] sm:$0xff]
        %v2027 = vld [vmem:[#allocation8 + $0xa0] sm:$0xff]
        %v2028 = vld [vmem:[#allocation8 + $0xa8] sm:$0xff]
        %v2029 = vld [vmem:[#allocation8 + $0xb0] sm:$0xff]
        %v2030 = vld [vmem:[#allocation8 + $0xb8] sm:$0xff]
        %v2031 = vld [vmem:[#allocation8 + $0xc0] sm:$0xff]
        %v2032 = vld [vmem:[#allocation8 + $0xc8] sm:$0xff]
        %v2033 = vld [vmem:[#allocation8 + $0xd0] sm:$0xff]
        %v2034 = vld [vmem:[#allocation8 + $0xd8] sm:$0xff]
        %v2035 = vld [vmem:[#allocation8 + $0xe0] sm:$0xff]
        %v2036 = vld [vmem:[#allocation8 + $0xe8] sm:$0xff]
        %v2037 = vld [vmem:[#allocation8 + $0xf0] sm:$0xff]
        %v2038 = vld [vmem:[#allocation8 + $0xf8] sm:$0xff]
        %v2039 = vld [vmem:[%s10] sm:$0x3]
        %v2041 = vlaneseq
        %v2042 = vshrl.u32 %v2041, 7
        %v2043 = vsub.s32 0, %v2042
        %v2044 = vrot.slane %v2039, %v2043
        %v2045 = vlaneseq
        %v2046 = vshrl.u32 %v2045, 7
        %v2047 = vsub.s32 1, %v2046
        %v2048 = vrot.slane %v2039, %v2047
        %v2083 = vunpack.c.l.b16 %v2007
        %v2084 = vunpack.c.h.b16 %v2007
        %v2085 = vunpack.c.l.b16 %v2008
        %v2086 = vunpack.c.h.b16 %v2008
        %v2087 = vunpack.c.l.b16 %v2009
        %v2088 = vunpack.c.h.b16 %v2009
        %v2089 = vunpack.c.l.b16 %v2010
        %v2090 = vunpack.c.h.b16 %v2010
        %v2091 = vunpack.c.l.b16 %v2011
        %v2092 = vunpack.c.h.b16 %v2011
        %v2093 = vunpack.c.l.b16 %v2012
        %v2094 = vunpack.c.h.b16 %v2012
        %v2095 = vunpack.c.l.b16 %v2013
        %v2096 = vunpack.c.h.b16 %v2013
        %v2097 = vunpack.c.l.b16 %v2014
        %v2098 = vunpack.c.h.b16 %v2014
        %v2099 = vunpack.c.l.b16 %v2015
        %v2100 = vunpack.c.h.b16 %v2015
        %v2101 = vunpack.c.l.b16 %v2016
        %v2102 = vunpack.c.h.b16 %v2016
        %v2103 = vunpack.c.l.b16 %v2017
        %v2104 = vunpack.c.h.b16 %v2017
        %v2105 = vunpack.c.l.b16 %v2018
        %v2106 = vunpack.c.h.b16 %v2018
        %v2107 = vunpack.c.l.b16 %v2019
        %v2108 = vunpack.c.h.b16 %v2019
        %v2109 = vunpack.c.l.b16 %v2020
        %v2110 = vunpack.c.h.b16 %v2020
        %v2111 = vunpack.c.l.b16 %v2021
        %v2112 = vunpack.c.h.b16 %v2021
        %v2113 = vunpack.c.l.b16 %v2022
        %v2114 = vunpack.c.h.b16 %v2022
        %v2115 = vunpack.c.l.b16 %v2023
        %v2116 = vunpack.c.h.b16 %v2023
        %v2117 = vunpack.c.l.b16 %v2024
        %v2118 = vunpack.c.h.b16 %v2024
        %v2119 = vunpack.c.l.b16 %v2025
        %v2120 = vunpack.c.h.b16 %v2025
        %v2121 = vunpack.c.l.b16 %v2026
        %v2122 = vunpack.c.h.b16 %v2026
        %v2123 = vunpack.c.l.b16 %v2027
        %v2124 = vunpack.c.h.b16 %v2027
        %v2125 = vunpack.c.l.b16 %v2028
        %v2126 = vunpack.c.h.b16 %v2028
        %v2127 = vunpack.c.l.b16 %v2029
        %v2128 = vunpack.c.h.b16 %v2029
        %v2129 = vunpack.c.l.b16 %v2030
        %v2130 = vunpack.c.h.b16 %v2030
        %v2131 = vunpack.c.l.b16 %v2031
        %v2132 = vunpack.c.h.b16 %v2031
        %v2133 = vunpack.c.l.b16 %v2032
        %v2134 = vunpack.c.h.b16 %v2032
        %v2135 = vunpack.c.l.b16 %v2033
        %v2136 = vunpack.c.h.b16 %v2033
        %v2137 = vunpack.c.l.b16 %v2034
        %v2138 = vunpack.c.h.b16 %v2034
        %v2139 = vunpack.c.l.b16 %v2035
        %v2140 = vunpack.c.h.b16 %v2035
        %v2141 = vunpack.c.l.b16 %v2036
        %v2142 = vunpack.c.h.b16 %v2036
        %v2143 = vunpack.c.l.b16 %v2037
        %v2144 = vunpack.c.h.b16 %v2037
        %v2145 = vunpack.c.l.b16 %v2038
        %v2146 = vunpack.c.h.b16 %v2038
        %v2147 = vpack.c.b16 %v2085, %v2083
        %v2148 = vpack.c.b16 %v2086, %v2084
        %v2149 = vpack.c.b16 %v2089, %v2087
        %v2150 = vpack.c.b16 %v2090, %v2088
        %v2151 = vpack.c.b16 %v2093, %v2091
        %v2152 = vpack.c.b16 %v2094, %v2092
        %v2153 = vpack.c.b16 %v2097, %v2095
        %v2154 = vpack.c.b16 %v2098, %v2096
        %v2155 = vpack.c.b16 %v2101, %v2099
        %v2156 = vpack.c.b16 %v2102, %v2100
        %v2157 = vpack.c.b16 %v2105, %v2103
        %v2158 = vpack.c.b16 %v2106, %v2104
        %v2159 = vpack.c.b16 %v2109, %v2107
        %v2160 = vpack.c.b16 %v2110, %v2108
        %v2161 = vpack.c.b16 %v2113, %v2111
        %v2162 = vpack.c.b16 %v2114, %v2112
        %v2163 = vpack.c.b16 %v2117, %v2115
        %v2164 = vpack.c.b16 %v2118, %v2116
        %v2165 = vpack.c.b16 %v2121, %v2119
        %v2166 = vpack.c.b16 %v2122, %v2120
        %v2167 = vpack.c.b16 %v2125, %v2123
        %v2168 = vpack.c.b16 %v2126, %v2124
        %v2169 = vpack.c.b16 %v2129, %v2127
        %v2170 = vpack.c.b16 %v2130, %v2128
        %v2171 = vpack.c.b16 %v2133, %v2131
        %v2172 = vpack.c.b16 %v2134, %v2132
        %v2173 = vpack.c.b16 %v2137, %v2135
        %v2174 = vpack.c.b16 %v2138, %v2136
        %v2175 = vpack.c.b16 %v2141, %v2139
        %v2176 = vpack.c.b16 %v2142, %v2140
        %v2177 = vpack.c.b16 %v2145, %v2143
        %v2178 = vpack.c.b16 %v2146, %v2144
        %2211 = vmatprep.subr.bf16.mxu0 %v2148
        %2212 = vmatpush1.bf16.msra.mxu0 %v2147
        %2213 = vmatprep.subr.bf16.mxu0 %v2150
        %2214 = vmatpush1.bf16.msra.mxu0 %v2149
        %2215 = vmatprep.subr.bf16.mxu0 %v2152
        %2216 = vmatpush1.bf16.msra.mxu0 %v2151
        %2217 = vmatprep.subr.bf16.mxu0 %v2154
        %2218 = vmatpush1.bf16.msra.mxu0 %v2153
        %2219 = vmatprep.subr.bf16.mxu0 %v2156
        %2220 = vmatpush1.bf16.msra.mxu0 %v2155
        %2221 = vmatprep.subr.bf16.mxu0 %v2158
        %2222 = vmatpush1.bf16.msra.mxu0 %v2157
        %2223 = vmatprep.subr.bf16.mxu0 %v2160
        %2224 = vmatpush1.bf16.msra.mxu0 %v2159
        %2225 = vmatprep.subr.bf16.mxu0 %v2162
        %2226 = vmatpush1.bf16.msra.mxu0 %v2161
        %2227 = vmatprep.subr.bf16.mxu0 %v2164
        %2228 = vmatpush1.bf16.msra.mxu0 %v2163
        %2229 = vmatprep.subr.bf16.mxu0 %v2166
        %2230 = vmatpush1.bf16.msra.mxu0 %v2165
        %2231 = vmatprep.subr.bf16.mxu0 %v2168
        %2232 = vmatpush1.bf16.msra.mxu0 %v2167
        %2233 = vmatprep.subr.bf16.mxu0 %v2170
        %2234 = vmatpush1.bf16.msra.mxu0 %v2169
        %2235 = vmatprep.subr.bf16.mxu0 %v2172
        %2236 = vmatpush1.bf16.msra.mxu0 %v2171
        %2237 = vmatprep.subr.bf16.mxu0 %v2174
        %2238 = vmatpush1.bf16.msra.mxu0 %v2173
        %2239 = vmatprep.subr.bf16.mxu0 %v2176
        %2240 = vmatpush1.bf16.msra.mxu0 %v2175
        %2241 = vmatprep.subr.bf16.mxu0 %v2178
        %2242 = vmatpush1.bf16.msra.mxu0 %v2177
        %2243 = vmatprep.mubr.bf16.mxu0 %v1992
        %2244 = vmatmul.mubr.bf16.gmra.mrb[0].mxu0 %v1991
        %v2245 = vpop.f32.mrb[0].mxu0
        %v2246 = vadd.f32 %v2044, %v2245
        %v2247 = vpop.f32.mrb[0].mxu0
        %v2248 = vadd.f32 %v2048, %v2247
        %v2249 = vpop.f32.mrb[0].mxu0
        %v2250 = vadd.f32 %v2044, %v2249
        %v2251 = vpop.f32.mrb[0].mxu0
        %v2252 = vadd.f32 %v2048, %v2251
        %2253 = vmatprep.mubr.bf16.mxu0 %v1994
        %2254 = vmatmul.mubr.bf16.gmra.mrb[0].mxu0 %v1993
        %v2255 = vpop.f32.mrb[0].mxu0
        %v2256 = vadd.f32 %v2044, %v2255
        %v2257 = vpop.f32.mrb[0].mxu0
        %v2258 = vadd.f32 %v2048, %v2257
        %v2259 = vpop.f32.mrb[0].mxu0
        %v2260 = vadd.f32 %v2044, %v2259
        %v2261 = vpop.f32.mrb[0].mxu0
        %v2262 = vadd.f32 %v2048, %v2261
        %2263 = vmatprep.mubr.bf16.mxu0 %v1996
        %2264 = vmatmul.mubr.bf16.gmra.mrb[0].mxu0 %v1995
        %v2265 = vpop.f32.mrb[0].mxu0
        %v2266 = vadd.f32 %v2044, %v2265
        %v2267 = vpop.f32.mrb[0].mxu0
        %v2268 = vadd.f32 %v2048, %v2267
        %v2269 = vpop.f32.mrb[0].mxu0
        %v2270 = vadd.f32 %v2044, %v2269
        %v2271 = vpop.f32.mrb[0].mxu0
        %v2272 = vadd.f32 %v2048, %v2271
        %2273 = vmatprep.mubr.bf16.mxu0 %v1998
        %2274 = vmatmul.mubr.bf16.gmra.mrb[0].mxu0 %v1997
        %v2275 = vpop.f32.mrb[0].mxu0
        %v2276 = vadd.f32 %v2044, %v2275
        %v2277 = vpop.f32.mrb[0].mxu0
        %v2278 = vadd.f32 %v2048, %v2277
        %v2279 = vpop.f32.mrb[0].mxu0
        %v2280 = vadd.f32 %v2044, %v2279
        %v2281 = vpop.f32.mrb[0].mxu0
        %v2282 = vadd.f32 %v2048, %v2281
        %2283 = vmatprep.mubr.bf16.mxu0 %v2000
        %2284 = vmatmul.mubr.bf16.gmra.mrb[0].mxu0 %v1999
        %v2285 = vpop.f32.mrb[0].mxu0
        %v2286 = vadd.f32 %v2044, %v2285
        %v2287 = vpop.f32.mrb[0].mxu0
        %v2288 = vadd.f32 %v2048, %v2287
        %v2289 = vpop.f32.mrb[0].mxu0
        %v2290 = vadd.f32 %v2044, %v2289
        %v2291 = vpop.f32.mrb[0].mxu0
        %v2292 = vadd.f32 %v2048, %v2291
        %2293 = vmatprep.mubr.bf16.mxu0 %v2002
        %2294 = vmatmul.mubr.bf16.gmra.mrb[0].mxu0 %v2001
        %v2295 = vpop.f32.mrb[0].mxu0
        %v2296 = vadd.f32 %v2044, %v2295
        %v2297 = vpop.f32.mrb[0].mxu0
        %v2298 = vadd.f32 %v2048, %v2297
        %v2299 = vpop.f32.mrb[0].mxu0
        %v2300 = vadd.f32 %v2044, %v2299
        %v2301 = vpop.f32.mrb[0].mxu0
        %v2302 = vadd.f32 %v2048, %v2301
        %2303 = vmatprep.mubr.bf16.mxu0 %v2004
        %2304 = vmatmul.mubr.bf16.gmra.mrb[0].mxu0 %v2003
        %v2305 = vpop.f32.mrb[0].mxu0
        %v2306 = vadd.f32 %v2044, %v2305
        %v2307 = vpop.f32.mrb[0].mxu0
        %v2308 = vadd.f32 %v2048, %v2307
        %v2309 = vpop.f32.mrb[0].mxu0
        %v2310 = vadd.f32 %v2044, %v2309
        %v2311 = vpop.f32.mrb[0].mxu0
        %v2312 = vadd.f32 %v2048, %v2311
        %2313 = vmatprep.mubr.bf16.mxu0 %v2006
        %2314 = vmatmul.mubr.bf16.gmra.mrb[0].mxu0 %v2005
        %v2315 = vpop.f32.mrb[0].mxu0
        %v2316 = vadd.f32 %v2044, %v2315
        %v2317 = vpop.f32.mrb[0].mxu0
        %v2318 = vadd.f32 %v2048, %v2317
        %v2319 = vpop.f32.mrb[0].mxu0
        %v2320 = vadd.f32 %v2044, %v2319
        %v2321 = vpop.f32.mrb[0].mxu0
        %v2322 = vadd.f32 %v2048, %v2321
        %2323 = vdwg.mxu0
        %v2324 = vmax.f32 %v2246, 0.0
        %v2325 = vmax.f32 %v2248, 0.0
        %v2326 = vmax.f32 %v2250, 0.0
        %v2327 = vmax.f32 %v2252, 0.0
        %v2328 = vmax.f32 %v2256, 0.0
        %v2329 = vmax.f32 %v2258, 0.0
        %v2330 = vmax.f32 %v2260, 0.0
        %v2331 = vmax.f32 %v2262, 0.0
        %v2332 = vmax.f32 %v2266, 0.0
        %v2333 = vmax.f32 %v2268, 0.0
        %v2334 = vmax.f32 %v2270, 0.0
        %v2335 = vmax.f32 %v2272, 0.0
        %v2336 = vmax.f32 %v2276, 0.0
        %v2337 = vmax.f32 %v2278, 0.0
        %v2338 = vmax.f32 %v2280, 0.0
        %v2339 = vmax.f32 %v2282, 0.0
        %v2340 = vmax.f32 %v2286, 0.0
        %v2341 = vmax.f32 %v2288, 0.0
        %v2342 = vmax.f32 %v2290, 0.0
        %v2343 = vmax.f32 %v2292, 0.0
        %v2344 = vmax.f32 %v2296, 0.0
        %v2345 = vmax.f32 %v2298, 0.0
        %v2346 = vmax.f32 %v2300, 0.0
        %v2347 = vmax.f32 %v2302, 0.0
        %v2348 = vmax.f32 %v2306, 0.0
        %v2349 = vmax.f32 %v2308, 0.0
        %v2350 = vmax.f32 %v2310, 0.0
        %v2351 = vmax.f32 %v2312, 0.0
        %v2352 = vmax.f32 %v2316, 0.0
        %v2353 = vmax.f32 %v2318, 0.0
        %v2354 = vmax.f32 %v2320, 0.0
        %v2355 = vmax.f32 %v2322, 0.0
        %v2356 = vpack.c.bf16 %v2326, %v2324
        %v2357 = vpack.c.bf16 %v2327, %v2325
        %v2358 = vpack.c.bf16 %v2330, %v2328
        %v2359 = vpack.c.bf16 %v2331, %v2329
        %v2360 = vpack.c.bf16 %v2334, %v2332
        %v2361 = vpack.c.bf16 %v2335, %v2333
        %v2362 = vpack.c.bf16 %v2338, %v2336
        %v2363 = vpack.c.bf16 %v2339, %v2337
        %v2364 = vpack.c.bf16 %v2342, %v2340
        %v2365 = vpack.c.bf16 %v2343, %v2341
        %v2366 = vpack.c.bf16 %v2346, %v2344
        %v2367 = vpack.c.bf16 %v2347, %v2345
        %v2368 = vpack.c.bf16 %v2350, %v2348
        %v2369 = vpack.c.bf16 %v2351, %v2349
        %v2370 = vpack.c.bf16 %v2354, %v2352
        %v2371 = vpack.c.bf16 %v2355, %v2353
        %v2372 = vld [vmem:[#allocation10] sm:$0xf]
        %v2373 = vld [vmem:[#allocation10 + $0x4] sm:$0xf]
        %v2374 = vld [vmem:[#allocation10 + $0x8] sm:$0xf]
        %v2375 = vld [vmem:[#allocation10 + $0xc] sm:$0xf]
        %v2376 = vld [vmem:[#allocation10 + $0x10] sm:$0xf]
        %v2377 = vld [vmem:[#allocation10 + $0x14] sm:$0xf]
        %v2378 = vld [vmem:[#allocation10 + $0x18] sm:$0xf]
        %v2379 = vld [vmem:[#allocation10 + $0x1c] sm:$0xf]
        %v2380 = vld [vmem:[#allocation10 + $0x20] sm:$0xf]
        %v2381 = vld [vmem:[#allocation10 + $0x24] sm:$0xf]
        %v2382 = vld [vmem:[#allocation10 + $0x28] sm:$0xf]
        %v2383 = vld [vmem:[#allocation10 + $0x2c] sm:$0xf]
        %v2384 = vld [vmem:[#allocation10 + $0x30] sm:$0xf]
        %v2385 = vld [vmem:[#allocation10 + $0x34] sm:$0xf]
        %v2386 = vld [vmem:[#allocation10 + $0x38] sm:$0xf]
        %v2387 = vld [vmem:[#allocation10 + $0x3c] sm:$0xf]
        %v2388 = vld [vmem:[#allocation10 + $0x40] sm:$0xf]
        %v2389 = vld [vmem:[#allocation10 + $0x44] sm:$0xf]
        %v2390 = vld [vmem:[#allocation10 + $0x48] sm:$0xf]
        %v2391 = vld [vmem:[#allocation10 + $0x4c] sm:$0xf]
        %v2392 = vld [vmem:[#allocation10 + $0x50] sm:$0xf]
        %v2393 = vld [vmem:[#allocation10 + $0x54] sm:$0xf]
        %v2394 = vld [vmem:[#allocation10 + $0x58] sm:$0xf]
        %v2395 = vld [vmem:[#allocation10 + $0x5c] sm:$0xf]
        %v2396 = vld [vmem:[#allocation10 + $0x60] sm:$0xf]
        %v2397 = vld [vmem:[#allocation10 + $0x64] sm:$0xf]
        %v2398 = vld [vmem:[#allocation10 + $0x68] sm:$0xf]
        %v2399 = vld [vmem:[#allocation10 + $0x6c] sm:$0xf]
        %v2400 = vld [vmem:[#allocation10 + $0x70] sm:$0xf]
        %v2401 = vld [vmem:[#allocation10 + $0x74] sm:$0xf]
        %v2402 = vld [vmem:[#allocation10 + $0x78] sm:$0xf]
        %v2403 = vld [vmem:[#allocation10 + $0x7c] sm:$0xf]
        %v2404 = vld [vmem:[#allocation10 + $0x80] sm:$0xf]
        %v2405 = vld [vmem:[#allocation10 + $0x84] sm:$0xf]
        %v2406 = vld [vmem:[#allocation10 + $0x88] sm:$0xf]
        %v2407 = vld [vmem:[#allocation10 + $0x8c] sm:$0xf]
        %v2408 = vld [vmem:[#allocation10 + $0x90] sm:$0xf]
        %v2409 = vld [vmem:[#allocation10 + $0x94] sm:$0xf]
        %v2410 = vld [vmem:[#allocation10 + $0x98] sm:$0xf]
        %v2411 = vld [vmem:[#allocation10 + $0x9c] sm:$0xf]
        %v2412 = vld [vmem:[#allocation10 + $0xa0] sm:$0xf]
        %v2413 = vld [vmem:[#allocation10 + $0xa4] sm:$0xf]
        %v2414 = vld [vmem:[#allocation10 + $0xa8] sm:$0xf]
        %v2415 = vld [vmem:[#allocation10 + $0xac] sm:$0xf]
        %v2416 = vld [vmem:[#allocation10 + $0xb0] sm:$0xf]
        %v2417 = vld [vmem:[#allocation10 + $0xb4] sm:$0xf]
        %v2418 = vld [vmem:[#allocation10 + $0xb8] sm:$0xf]
        %v2419 = vld [vmem:[#allocation10 + $0xbc] sm:$0xf]
        %v2420 = vld [vmem:[#allocation10 + $0xc0] sm:$0xf]
        %v2421 = vld [vmem:[#allocation10 + $0xc4] sm:$0xf]
        %v2422 = vld [vmem:[#allocation10 + $0xc8] sm:$0xf]
        %v2423 = vld [vmem:[#allocation10 + $0xcc] sm:$0xf]
        %v2424 = vld [vmem:[#allocation10 + $0xd0] sm:$0xf]
        %v2425 = vld [vmem:[#allocation10 + $0xd4] sm:$0xf]
        %v2426 = vld [vmem:[#allocation10 + $0xd8] sm:$0xf]
        %v2427 = vld [vmem:[#allocation10 + $0xdc] sm:$0xf]
        %v2428 = vld [vmem:[#allocation10 + $0xe0] sm:$0xf]
        %v2429 = vld [vmem:[#allocation10 + $0xe4] sm:$0xf]
        %v2430 = vld [vmem:[#allocation10 + $0xe8] sm:$0xf]
        %v2431 = vld [vmem:[#allocation10 + $0xec] sm:$0xf]
        %v2432 = vld [vmem:[#allocation10 + $0xf0] sm:$0xf]
        %v2433 = vld [vmem:[#allocation10 + $0xf4] sm:$0xf]
        %v2434 = vld [vmem:[#allocation10 + $0xf8] sm:$0xf]
        %v2435 = vld [vmem:[#allocation10 + $0xfc] sm:$0xf]
        %v2436 = vld [vmem:[%s12] sm:$0x1]
        %v2438 = vlaneseq
        %v2439 = vshrl.u32 %v2438, 7
        %v2440 = vsub.s32 0, %v2439
        %v2441 = vrot.slane %v2436, %v2440
        %v2507 = vunpack.c.l.b16 %v2372
        %v2508 = vunpack.c.l.b16 %v2373
        %v2509 = vunpack.c.l.b16 %v2374
        %v2510 = vunpack.c.l.b16 %v2375
        %v2511 = vunpack.c.l.b16 %v2376
        %v2512 = vunpack.c.l.b16 %v2377
        %v2513 = vunpack.c.l.b16 %v2378
        %v2514 = vunpack.c.l.b16 %v2379
        %v2515 = vunpack.c.l.b16 %v2380
        %v2516 = vunpack.c.l.b16 %v2381
        %v2517 = vunpack.c.l.b16 %v2382
        %v2518 = vunpack.c.l.b16 %v2383
        %v2519 = vunpack.c.l.b16 %v2384
        %v2520 = vunpack.c.l.b16 %v2385
        %v2521 = vunpack.c.l.b16 %v2386
        %v2522 = vunpack.c.l.b16 %v2387
        %v2523 = vunpack.c.l.b16 %v2388
        %v2524 = vunpack.c.l.b16 %v2389
        %v2525 = vunpack.c.l.b16 %v2390
        %v2526 = vunpack.c.l.b16 %v2391
        %v2527 = vunpack.c.l.b16 %v2392
        %v2528 = vunpack.c.l.b16 %v2393
        %v2529 = vunpack.c.l.b16 %v2394
        %v2530 = vunpack.c.l.b16 %v2395
        %v2531 = vunpack.c.l.b16 %v2396
        %v2532 = vunpack.c.l.b16 %v2397
        %v2533 = vunpack.c.l.b16 %v2398
        %v2534 = vunpack.c.l.b16 %v2399
        %v2535 = vunpack.c.l.b16 %v2400
        %v2536 = vunpack.c.l.b16 %v2401
        %v2537 = vunpack.c.l.b16 %v2402
        %v2538 = vunpack.c.l.b16 %v2403
        %v2539 = vunpack.c.l.b16 %v2404
        %v2540 = vunpack.c.l.b16 %v2405
        %v2541 = vunpack.c.l.b16 %v2406
        %v2542 = vunpack.c.l.b16 %v2407
        %v2543 = vunpack.c.l.b16 %v2408
        %v2544 = vunpack.c.l.b16 %v2409
        %v2545 = vunpack.c.l.b16 %v2410
        %v2546 = vunpack.c.l.b16 %v2411
        %v2547 = vunpack.c.l.b16 %v2412
        %v2548 = vunpack.c.l.b16 %v2413
        %v2549 = vunpack.c.l.b16 %v2414
        %v2550 = vunpack.c.l.b16 %v2415
        %v2551 = vunpack.c.l.b16 %v2416
        %v2552 = vunpack.c.l.b16 %v2417
        %v2553 = vunpack.c.l.b16 %v2418
        %v2554 = vunpack.c.l.b16 %v2419
        %v2555 = vunpack.c.l.b16 %v2420
        %v2556 = vunpack.c.l.b16 %v2421
        %v2557 = vunpack.c.l.b16 %v2422
        %v2558 = vunpack.c.l.b16 %v2423
        %v2559 = vunpack.c.l.b16 %v2424
        %v2560 = vunpack.c.l.b16 %v2425
        %v2561 = vunpack.c.l.b16 %v2426
        %v2562 = vunpack.c.l.b16 %v2427
        %v2563 = vunpack.c.l.b16 %v2428
        %v2564 = vunpack.c.l.b16 %v2429
        %v2565 = vunpack.c.l.b16 %v2430
        %v2566 = vunpack.c.l.b16 %v2431
        %v2567 = vunpack.c.l.b16 %v2432
        %v2568 = vunpack.c.l.b16 %v2433
        %v2569 = vunpack.c.l.b16 %v2434
        %v2570 = vunpack.c.l.b16 %v2435
        %v2571 = vpack.c.b16 %v2508, %v2507
        %v2572 = vpack.c.b16 %v2510, %v2509
        %v2573 = vpack.c.b16 %v2512, %v2511
        %v2574 = vpack.c.b16 %v2514, %v2513
        %v2575 = vpack.c.b16 %v2516, %v2515
        %v2576 = vpack.c.b16 %v2518, %v2517
        %v2577 = vpack.c.b16 %v2520, %v2519
        %v2578 = vpack.c.b16 %v2522, %v2521
        %v2579 = vpack.c.b16 %v2524, %v2523
        %v2580 = vpack.c.b16 %v2526, %v2525
        %v2581 = vpack.c.b16 %v2528, %v2527
        %v2582 = vpack.c.b16 %v2530, %v2529
        %v2583 = vpack.c.b16 %v2532, %v2531
        %v2584 = vpack.c.b16 %v2534, %v2533
        %v2585 = vpack.c.b16 %v2536, %v2535
        %v2586 = vpack.c.b16 %v2538, %v2537
        %v2587 = vpack.c.b16 %v2540, %v2539
        %v2588 = vpack.c.b16 %v2542, %v2541
        %v2589 = vpack.c.b16 %v2544, %v2543
        %v2590 = vpack.c.b16 %v2546, %v2545
        %v2591 = vpack.c.b16 %v2548, %v2547
        %v2592 = vpack.c.b16 %v2550, %v2549
        %v2593 = vpack.c.b16 %v2552, %v2551
        %v2594 = vpack.c.b16 %v2554, %v2553
        %v2595 = vpack.c.b16 %v2556, %v2555
        %v2596 = vpack.c.b16 %v2558, %v2557
        %v2597 = vpack.c.b16 %v2560, %v2559
        %v2598 = vpack.c.b16 %v2562, %v2561
        %v2599 = vpack.c.b16 %v2564, %v2563
        %v2600 = vpack.c.b16 %v2566, %v2565
        %v2601 = vpack.c.b16 %v2568, %v2567
        %v2602 = vpack.c.b16 %v2570, %v2569
        %2635 = vmatprep.subr.bf16.mxu0 0
        %2636 = vmatpush1.bf16.msra.mxu0 %v2571
        %2637 = vmatprep.subr.bf16.mxu0 0
        %2638 = vmatpush1.bf16.msra.mxu0 %v2572
        %2639 = vmatprep.subr.bf16.mxu0 0
        %2640 = vmatpush1.bf16.msra.mxu0 %v2573
        %2641 = vmatprep.subr.bf16.mxu0 0
        %2642 = vmatpush1.bf16.msra.mxu0 %v2574
        %2643 = vmatprep.subr.bf16.mxu0 0
        %2644 = vmatpush1.bf16.msra.mxu0 %v2575
        %2645 = vmatprep.subr.bf16.mxu0 0
        %2646 = vmatpush1.bf16.msra.mxu0 %v2576
        %2647 = vmatprep.subr.bf16.mxu0 0
        %2648 = vmatpush1.bf16.msra.mxu0 %v2577
        %2649 = vmatprep.subr.bf16.mxu0 0
        %2650 = vmatpush1.bf16.msra.mxu0 %v2578
        %2651 = vmatprep.subr.bf16.mxu0 0
        %2652 = vmatpush1.bf16.msra.mxu0 %v2579
        %2653 = vmatprep.subr.bf16.mxu0 0
        %2654 = vmatpush1.bf16.msra.mxu0 %v2580
        %2655 = vmatprep.subr.bf16.mxu0 0
        %2656 = vmatpush1.bf16.msra.mxu0 %v2581
        %2657 = vmatprep.subr.bf16.mxu0 0
        %2658 = vmatpush1.bf16.msra.mxu0 %v2582
        %2659 = vmatprep.subr.bf16.mxu0 0
        %2660 = vmatpush1.bf16.msra.mxu0 %v2583
        %2661 = vmatprep.subr.bf16.mxu0 0
        %2662 = vmatpush1.bf16.msra.mxu0 %v2584
        %2663 = vmatprep.subr.bf16.mxu0 0
        %2664 = vmatpush1.bf16.msra.mxu0 %v2585
        %2665 = vmatprep.subr.bf16.mxu0 0
        %2666 = vmatpush1.bf16.msra.mxu0 %v2586
        %2667 = vmatprep.mubr.bf16.mxu0 %v1944
        %2668 = vmatmul.mubr.bf16.gmra.mrb[0].mxu0 %v1943
        %v2669 = vpop.f32.mrb[0].mxu0
        %v2670 = vadd.f32 %v2441, %v2669
        %v2671 = vpop.f32.mrb[0].mxu0
        %v2672 = vpop.f32.mrb[0].mxu0
        %v2673 = vadd.f32 %v2441, %v2672
        %v2674 = vpop.f32.mrb[0].mxu0
        %2675 = vmatprep.mubr.bf16.mxu0 %v1946
        %2676 = vmatmul.mubr.bf16.gmra.mrb[0].mxu0 %v1945
        %v2677 = vpop.f32.mrb[0].mxu0
        %v2678 = vadd.f32 %v2441, %v2677
        %v2679 = vpop.f32.mrb[0].mxu0
        %v2680 = vpop.f32.mrb[0].mxu0
        %v2681 = vadd.f32 %v2441, %v2680
        %v2682 = vpop.f32.mrb[0].mxu0
        %2683 = vmatprep.mubr.bf16.mxu0 %v1948
        %2684 = vmatmul.mubr.bf16.gmra.mrb[0].mxu0 %v1947
        %v2685 = vpop.f32.mrb[0].mxu0
        %v2686 = vadd.f32 %v2441, %v2685
        %v2687 = vpop.f32.mrb[0].mxu0
        %v2688 = vpop.f32.mrb[0].mxu0
        %v2689 = vadd.f32 %v2441, %v2688
        %v2690 = vpop.f32.mrb[0].mxu0
        %2691 = vmatprep.mubr.bf16.mxu0 %v1950
        %2692 = vmatmul.mubr.bf16.gmra.mrb[0].mxu0 %v1949
        %v2693 = vpop.f32.mrb[0].mxu0
        %v2694 = vadd.f32 %v2441, %v2693
        %v2695 = vpop.f32.mrb[0].mxu0
        %v2696 = vpop.f32.mrb[0].mxu0
        %v2697 = vadd.f32 %v2441, %v2696
        %v2698 = vpop.f32.mrb[0].mxu0
        %2699 = vmatprep.mubr.bf16.mxu0 %v1952
        %2700 = vmatmul.mubr.bf16.gmra.mrb[0].mxu0 %v1951
        %v2701 = vpop.f32.mrb[0].mxu0
        %v2702 = vadd.f32 %v2441, %v2701
        %v2703 = vpop.f32.mrb[0].mxu0
        %v2704 = vpop.f32.mrb[0].mxu0
        %v2705 = vadd.f32 %v2441, %v2704
        %v2706 = vpop.f32.mrb[0].mxu0
        %2707 = vmatprep.mubr.bf16.mxu0 %v1954
        %2708 = vmatmul.mubr.bf16.gmra.mrb[0].mxu0 %v1953
        %v2709 = vpop.f32.mrb[0].mxu0
        %v2710 = vadd.f32 %v2441, %v2709
        %v2711 = vpop.f32.mrb[0].mxu0
        %v2712 = vpop.f32.mrb[0].mxu0
        %v2713 = vadd.f32 %v2441, %v2712
        %v2714 = vpop.f32.mrb[0].mxu0
        %2715 = vmatprep.mubr.bf16.mxu0 %v1956
        %2716 = vmatmul.mubr.bf16.gmra.mrb[0].mxu0 %v1955
        %v2717 = vpop.f32.mrb[0].mxu0
        %v2718 = vadd.f32 %v2441, %v2717
        %v2719 = vpop.f32.mrb[0].mxu0
        %v2720 = vpop.f32.mrb[0].mxu0
        %v2721 = vadd.f32 %v2441, %v2720
        %v2722 = vpop.f32.mrb[0].mxu0
        %2723 = vmatprep.mubr.bf16.mxu0 %v1958
        %2724 = vmatmul.mubr.bf16.gmra.mrb[0].mxu0 %v1957
        %v2725 = vpop.f32.mrb[0].mxu0
        %v2726 = vadd.f32 %v2441, %v2725
        %v2727 = vpop.f32.mrb[0].mxu0
        %v2728 = vpop.f32.mrb[0].mxu0
        %v2729 = vadd.f32 %v2441, %v2728
        %v2730 = vpop.f32.mrb[0].mxu0
        %2731 = vdwg.mxu0
        %2732 = vmatprep.subr.bf16.mxu0 0
        %2733 = vmatpush1.bf16.msra.mxu0 %v2587
        %2734 = vmatprep.subr.bf16.mxu0 0
        %2735 = vmatpush1.bf16.msra.mxu0 %v2588
        %2736 = vmatprep.subr.bf16.mxu0 0
        %2737 = vmatpush1.bf16.msra.mxu0 %v2589
        %2738 = vmatprep.subr.bf16.mxu0 0
        %2739 = vmatpush1.bf16.msra.mxu0 %v2590
        %2740 = vmatprep.subr.bf16.mxu0 0
        %2741 = vmatpush1.bf16.msra.mxu0 %v2591
        %2742 = vmatprep.subr.bf16.mxu0 0
        %2743 = vmatpush1.bf16.msra.mxu0 %v2592
        %2744 = vmatprep.subr.bf16.mxu0 0
        %2745 = vmatpush1.bf16.msra.mxu0 %v2593
        %2746 = vmatprep.subr.bf16.mxu0 0
        %2747 = vmatpush1.bf16.msra.mxu0 %v2594
        %2748 = vmatprep.subr.bf16.mxu0 0
        %2749 = vmatpush1.bf16.msra.mxu0 %v2595
        %2750 = vmatprep.subr.bf16.mxu0 0
        %2751 = vmatpush1.bf16.msra.mxu0 %v2596
        %2752 = vmatprep.subr.bf16.mxu0 0
        %2753 = vmatpush1.bf16.msra.mxu0 %v2597
        %2754 = vmatprep.subr.bf16.mxu0 0
        %2755 = vmatpush1.bf16.msra.mxu0 %v2598
        %2756 = vmatprep.subr.bf16.mxu0 0
        %2757 = vmatpush1.bf16.msra.mxu0 %v2599
        %2758 = vmatprep.subr.bf16.mxu0 0
        %2759 = vmatpush1.bf16.msra.mxu0 %v2600
        %2760 = vmatprep.subr.bf16.mxu0 0
        %2761 = vmatpush1.bf16.msra.mxu0 %v2601
        %2762 = vmatprep.subr.bf16.mxu0 0
        %2763 = vmatpush1.bf16.msra.mxu0 %v2602
        %2764 = vmatprep.mubr.bf16.mxu0 %v2357
        %2765 = vmatmul.mubr.bf16.gmra.mrb[0].mxu0 %v2356
        %v2766 = vpop.f32.mrb[0].mxu0
        %v2767 = vadd.f32 %v2670, %v2766
        %v2768 = vpop.f32.mrb[0].mxu0
        %v2769 = vpop.f32.mrb[0].mxu0
        %v2770 = vadd.f32 %v2673, %v2769
        %v2771 = vpop.f32.mrb[0].mxu0
        %2772 = vmatprep.mubr.bf16.mxu0 %v2359
        %2773 = vmatmul.mubr.bf16.gmra.mrb[0].mxu0 %v2358
        %v2774 = vpop.f32.mrb[0].mxu0
        %v2775 = vadd.f32 %v2678, %v2774
        %v2776 = vpop.f32.mrb[0].mxu0
        %v2777 = vpop.f32.mrb[0].mxu0
        %v2778 = vadd.f32 %v2681, %v2777
        %v2779 = vpop.f32.mrb[0].mxu0
        %2780 = vmatprep.mubr.bf16.mxu0 %v2361
        %2781 = vmatmul.mubr.bf16.gmra.mrb[0].mxu0 %v2360
        %v2782 = vpop.f32.mrb[0].mxu0
        %v2783 = vadd.f32 %v2686, %v2782
        %v2784 = vpop.f32.mrb[0].mxu0
        %v2785 = vpop.f32.mrb[0].mxu0
        %v2786 = vadd.f32 %v2689, %v2785
        %v2787 = vpop.f32.mrb[0].mxu0
        %2788 = vmatprep.mubr.bf16.mxu0 %v2363
        %2789 = vmatmul.mubr.bf16.gmra.mrb[0].mxu0 %v2362
        %v2790 = vpop.f32.mrb[0].mxu0
        %v2791 = vadd.f32 %v2694, %v2790
        %v2792 = vpop.f32.mrb[0].mxu0
        %v2793 = vpop.f32.mrb[0].mxu0
        %v2794 = vadd.f32 %v2697, %v2793
        %v2795 = vpop.f32.mrb[0].mxu0
        %2796 = vmatprep.mubr.bf16.mxu0 %v2365
        %2797 = vmatmul.mubr.bf16.gmra.mrb[0].mxu0 %v2364
        %v2798 = vpop.f32.mrb[0].mxu0
        %v2799 = vadd.f32 %v2702, %v2798
        %v2800 = vpop.f32.mrb[0].mxu0
        %v2801 = vpop.f32.mrb[0].mxu0
        %v2802 = vadd.f32 %v2705, %v2801
        %v2803 = vpop.f32.mrb[0].mxu0
        %2804 = vmatprep.mubr.bf16.mxu0 %v2367
        %2805 = vmatmul.mubr.bf16.gmra.mrb[0].mxu0 %v2366
        %v2806 = vpop.f32.mrb[0].mxu0
        %v2807 = vadd.f32 %v2710, %v2806
        %v2808 = vpop.f32.mrb[0].mxu0
        %v2809 = vpop.f32.mrb[0].mxu0
        %v2810 = vadd.f32 %v2713, %v2809
        %v2811 = vpop.f32.mrb[0].mxu0
        %2812 = vmatprep.mubr.bf16.mxu0 %v2369
        %2813 = vmatmul.mubr.bf16.gmra.mrb[0].mxu0 %v2368
        %v2814 = vpop.f32.mrb[0].mxu0
        %v2815 = vadd.f32 %v2718, %v2814
        %v2816 = vpop.f32.mrb[0].mxu0
        %v2817 = vpop.f32.mrb[0].mxu0
        %v2818 = vadd.f32 %v2721, %v2817
        %v2819 = vpop.f32.mrb[0].mxu0
        %2820 = vmatprep.mubr.bf16.mxu0 %v2371
        %2821 = vmatmul.mubr.bf16.gmra.mrb[0].mxu0 %v2370
        %v2822 = vpop.f32.mrb[0].mxu0
        %v2823 = vadd.f32 %v2726, %v2822
        %v2824 = vpop.f32.mrb[0].mxu0
        %v2825 = vpop.f32.mrb[0].mxu0
        %v2826 = vadd.f32 %v2729, %v2825
        %v2827 = vpop.f32.mrb[0].mxu0
        %2828 = vdwg.mxu0
        %v2829 = vadd.f32 %v1623, %v2767
        %v2830 = vadd.f32 %v1627, %v2770
        %v2831 = vadd.f32 %v1633, %v2775
        %v2832 = vadd.f32 %v1637, %v2778
        %v2833 = vadd.f32 %v1643, %v2783
        %v2834 = vadd.f32 %v1647, %v2786
        %v2835 = vadd.f32 %v1653, %v2791
        %v2836 = vadd.f32 %v1657, %v2794
        %v2837 = vadd.f32 %v1663, %v2799
        %v2838 = vadd.f32 %v1667, %v2802
        %v2839 = vadd.f32 %v1673, %v2807
        %v2840 = vadd.f32 %v1677, %v2810
        %v2841 = vadd.f32 %v1683, %v2815
        %v2842 = vadd.f32 %v1687, %v2818
        %v2843 = vadd.f32 %v1693, %v2823
        %v2844 = vadd.f32 %v1697, %v2826
        %2845 = vst [vmem:[%s555] sm:$0xff] %v2829
        %2846 = vst [vmem:[%s555 + $0x8] sm:$0xff] %v2830
        %2847 = vst [vmem:[%s555 + $0x10] sm:$0xff] %v2831
        %2848 = vst [vmem:[%s555 + $0x18] sm:$0xff] %v2832
        %2849 = vst [vmem:[%s555 + $0x20] sm:$0xff] %v2833
        %2850 = vst [vmem:[%s555 + $0x28] sm:$0xff] %v2834
        %2851 = vst [vmem:[%s555 + $0x30] sm:$0xff] %v2835
        %2852 = vst [vmem:[%s555 + $0x38] sm:$0xff] %v2836
        %2853 = vst [vmem:[%s555 + $0x40] sm:$0xff] %v2837
        %2854 = vst [vmem:[%s555 + $0x48] sm:$0xff] %v2838
        %2855 = vst [vmem:[%s555 + $0x50] sm:$0xff] %v2839
        %2856 = vst [vmem:[%s555 + $0x58] sm:$0xff] %v2840
        %2857 = vst [vmem:[%s555 + $0x60] sm:$0xff] %v2841
        %2858 = vst [vmem:[%s555 + $0x68] sm:$0xff] %v2842
        %2859 = vst [vmem:[%s555 + $0x70] sm:$0xff] %v2843
        %2860 = vst [vmem:[%s555 + $0x78] sm:$0xff] %v2844
        %s2861 = sand.u32 %s323, 1
        %s2862 = scalar_lea.sflag [#allocation4], %s2861
        %s2863 = sand.u32 %s323, 1
        %s2864 = smul.addr %s2863, 128
        %s2865 = scalar_lea.vmem [#allocation11], %s2864
        %s2866 = sand.u32 %s349, 1
        %s2867 = scalar_lea.sflag [#allocation13], %s2866
        %s2868 = sand.u32 %s349, 1
        %s2869 = smul.addr %s2868, 128
        %s2870 = scalar_lea.vmem [#allocation12], %s2869
        // Predicated region
        $region93: #{tpu_custom_call.1} parent=71 // pred_check
          %p2871 = pneg %p333
        $region94: #{tpu_custom_call.1} parent=71 // pred_check_branch
          %2873 = sbr.rel (%p2871) target = $region96
        $region95: #{tpu_custom_call.1} parent=71 // pred_region
          %s2874 = smul.u32 16, %s37
          %s2876 = ssub.s32 2048, 2048
          %2877 = vsyncadd %s2862, %s2876
          %s2878 = smul.addr %s2874, 128
          %s2879 = scalar_lea.hbm %s13, %s2878
          %s2880 = sshll.u32 %s2865, 4
          %s2881 = int_to_ptr.vmem [resolvable:$true] %s2880
          %2886 = dma.vmem_to_hbm [thread:$0]  %s2881, 2048, %s2879, %s2862, 128, 128, 8
        $region96: #{tpu_custom_call.1} parent=71 // pred_fallthru
          _
        // Predicated region
        $region97: #{tpu_custom_call.1} parent=71 // pred_check
          %p2887 = pneg %p359
        $region98: #{tpu_custom_call.1} parent=71 // pred_check_branch
          %2889 = sbr.rel (%p2887) target = $region100
        $region99: #{tpu_custom_call.1} parent=71 // pred_region
          %s2890 = smul.u32 16, %s37
          %s2892 = ssub.s32 2048, 2048
          %2893 = vsyncadd %s2867, %s2892
          %s2894 = smul.addr %s2890, 128
          %s2895 = scalar_lea.hbm %s14, %s2894
          %s2896 = sshll.u32 %s2870, 4
          %s2897 = int_to_ptr.vmem [resolvable:$true] %s2896
          %2902 = dma.vmem_to_hbm [thread:$0]  %s2897, 2048, %s2895, %s2867, 128, 128, 8
        $region100: #{tpu_custom_call.1} parent=71 // pred_fallthru
          _
      $region72: #{tpu_custom_call.1} parent=5 // pred_fallthru
        _
      %p2903 = scmp.le.s32.totalorder 2, %s32
      // Predicated region
      $region101: #{tpu_custom_call.1} parent=5 // pred_check
        %p2904 = pneg %p2903
      $region102: #{tpu_custom_call.1} parent=5 // pred_check_branch
        %2906 = sbr.rel (%p2904) target = $region104
      $region103: #{tpu_custom_call.1} parent=5 // pred_region
        %s2907 = ssub.s32 %s32, 2
        // Predicated region
        $region105: #{tpu_custom_call.1} parent=103 // pred_check
          %p2908 = pneg %p339
        $region106: #{tpu_custom_call.1} parent=103 // pred_check_branch
          %2910 = sbr.rel (%p2908) target = $region108
        $region107: #{tpu_custom_call.1} parent=103 // pred_region
          %s2911 = sand.u32 %s324, 1
          %s2912 = scalar_lea.sflag [#allocation4], %s2911
          %s2913 = sand.u32 %s324, 1
          %s2914 = smul.addr %s2913, 128
          %s2915 = scalar_lea.vmem [#allocation11], %s2914
          %2916 = dma.done %s2912, 2048
        $region108: #{tpu_custom_call.1} parent=103 // pred_fallthru
          _
        // Predicated region
        $region109: #{tpu_custom_call.1} parent=103 // pred_check
          %p2917 = pneg %p365
        $region110: #{tpu_custom_call.1} parent=103 // pred_check_branch
          %2919 = sbr.rel (%p2917) target = $region112
        $region111: #{tpu_custom_call.1} parent=103 // pred_region
          %s2920 = sand.u32 %s350, 1
          %s2921 = scalar_lea.sflag [#allocation13], %s2920
          %s2922 = sand.u32 %s350, 1
          %s2923 = smul.addr %s2922, 128
          %s2924 = scalar_lea.vmem [#allocation12], %s2923
          %2925 = dma.done %s2921, 2048
        $region112: #{tpu_custom_call.1} parent=103 // pred_fallthru
          _
      $region104: #{tpu_custom_call.1} parent=5 // pred_fallthru
        _
    $region6: #{tpu_custom_call.1} parent=1 // loop_footer
      %s36 = sadd.s32 1, %s32
    $region7: #{tpu_custom_call.1} parent=1 // loop_footer_branch
      %31 = sbr.rel target = $region3
    $region8: #{tpu_custom_call.1} parent=1 // loop_exit
      _
    %2926 = vsyncpa [#allocation3], 1
    %s2927 = scalar_lea.sflag [#allocation3], 1
    %2928 = vsyncpa %s2927, 1
    %2929 = vsyncpa [#allocation6], 1
    %2930 = vsyncpa [#allocation9], 1
    %2931 = vsyncpa [#allocation4], 1
    %s2932 = scalar_lea.sflag [#allocation4], 1
    %2933 = vsyncpa %s2932, 1
    %2934 = vsyncpa [#allocation13], 1
    %s2935 = scalar_lea.sflag [#allocation13], 1
    %2936 = vsyncpa %s2935, 1

</llo_original>
